<compile_context>
chip_gen: v7x
topology: tpu7x:2x2x1
jax: 0.10.0
libtpu: 0.0.40
codegen_flags: <defaults>
</compile_context>

<pallas_src>
import functools

import jax
import jax.numpy as jnp
from jax import lax
from jax.experimental import pallas as pl
from jax.experimental.pallas import tpu as pltpu


def _conv_bn_relu_kernel(x_ref, w_ref, b_ref, o_ref, *, k, stride, th, w_out,
                         cout_minor):
    """One (batch, H-tile) grid step.

    x_ref: (TH_in, Wp, Cin)      halo'd, spatially padded NHWC input window
                                 (bf16 or f32, cast once in the wrapper)
    w_ref: cout_minor=False: (k, Cout, k*Cin)   BN-folded weight, dh-major
           cout_minor=True : (k, k*Cin, Cout)
    b_ref: (Cout, 1)             BN-folded bias (f32)
    o_ref: (Cout, TH*W_out)      lane-dense output block (NCHW-flat)
    """
    m = th * w_out
    xp = x_ref[...]

    # k column(dw)-shifted slabs, each reused across the k row (dh) shifts.
    col = [xp[:, dw:dw + (w_out - 1) * stride + 1:stride, :] for dw in range(k)]

    acc = None
    for dh in range(k):
        row_hi = dh + (th - 1) * stride + 1
        # per-dh im2col slab: (TH, W_out, k*Cin) -> (M, k*Cin); peak VMEM ~1/k of
        # the full k^2*Cin slab.
        a = jnp.concatenate([col[dw][dh:row_hi:stride] for dw in range(k)],
                            axis=-1).reshape(m, -1)
        w_dh = w_ref[dh]                                   # static leading-dim index
        if cout_minor:
            # standard orientation: a(M,K) @ w(K,Cout) -> (M,Cout), no operand
            # transpose; result tile is transposed once after the dh loop.
            y = lax.dot_general(a, w_dh, (((1,), (0,)), ((), ())),
                                preferred_element_type=jnp.float32)
        else:
            # attention-style transposed-RHS form -> (Cout, M) directly.
            y = lax.dot_general(w_dh, a, (((1,), (1,)), ((), ())),
                                preferred_element_type=jnp.float32)
        acc = y if acc is None else acc + y

    if cout_minor:
        acc = acc.T                                        # (M,Cout) -> (Cout,M), XLU

    acc = acc + b_ref[...].astype(jnp.float32)
    o_ref[...] = jnp.maximum(acc, 0.0).astype(o_ref.dtype)  # fused ReLU


def _vmem_budget_bytes():
    """Generation-aware vmem_limit: ~64 MiB on 128 MiB parts (v5e/v6e), ~48 MiB
    on 64 MiB parts (v7x).  Conservative fallback if the query is unavailable."""
    try:
        cap = int(pltpu.get_tpu_info().vmem_capacity_bytes)
    except Exception:  # noqa: BLE001
        cap = 64 * 1024 * 1024
    if cap >= 128 * 1024 * 1024:
        return 64 * 1024 * 1024
    return min(48 * 1024 * 1024, (cap * 3) // 4)


def _pick_tile_h(h_out, w_out, cin, cout, k, stride, wp,
                 x_item, w_item, out_item, requested, budget_bytes):
    """Largest H-tile (divisor of H_out, preferring (th*W_out) % 128 == 0 so the
    output lane dim is unmasked) whose TOTAL resident-buffer estimate fits."""
    def est(th):
        th_in = (th - 1) * stride + k
        m = th * w_out
        return (2 * th_in * wp * cin * x_item          # double-buffered input window
                + 2 * k * k * cin * cout * w_item      # weight (<= 2 buffers)
                + 2 * cout * 4                         # bias
                + 2 * cout * m * out_item              # double-buffered output block
                + 2 * m * k * cin * x_item             # per-dh im2col slab + headroom
                + cout * m * 4)                        # f32 accumulator tile

    divisors = [d for d in range(1, h_out + 1) if h_out % d == 0]
    valid = [d for d in divisors if (d * w_out) % 128 == 0 or d == h_out]
    if requested is not None:
        cands = [d for d in valid if d <= requested]
        return max(cands) if cands else min(valid)
    fitting = [d for d in valid if est(d) <= budget_bytes]
    return max(fitting) if fitting else min(valid)


def conv_bn_relu(x_nchw, conv_w, bn_gamma, bn_beta, bn_mean, bn_var, *,
                 stride=1, eps=1e-5, conv_b=None, tile_h=None, use_bf16=True):
    """Forward of Conv(in_ch, out_ch, k, stride) + eval BN + ReLU.  NCHW in/out."""
    N, Cin, H, W = x_nchw.shape
    Cout, Cin_w, k, k2 = conv_w.shape
    assert Cin_w == Cin and k == k2 and (k % 2 == 1)
    p = k // 2
    H_out = (H + 2 * p - k) // stride + 1
    W_out = (W + 2 * p - k) // stride + 1
    Wp = W + 2 * p
    out_dtype = x_nchw.dtype
    compute_dtype = jnp.bfloat16 if use_bf16 else jnp.float32
    cout_minor = Cout >= 128                       # flipped MXU orientation

    # ---- fold eval-mode BatchNorm into the conv weight / bias ------------------
    inv = bn_gamma / jnp.sqrt(bn_var + eps)                       # (Cout,)
    w_fold = conv_w * inv[:, None, None, None]
    b_fold = bn_beta - bn_mean * inv
    if conv_b is not None:
        b_fold = b_fold + conv_b * inv
    if cout_minor:
        # (Cout, Cin, kh, kw) -> (kh, kw, Cin, Cout) -> (k, k*Cin, Cout)
        w_arr = jnp.transpose(w_fold, (2, 3, 1, 0)).reshape(k, k * Cin, Cout)
    else:
        # (Cout, Cin, kh, kw) -> (kh, Cout, kw, Cin) -> (k, Cout, k*Cin)
        w_arr = jnp.transpose(w_fold, (2, 0, 3, 1)).reshape(k, Cout, k * Cin)
    w_arr = w_arr.astype(compute_dtype)            # bf16 cast hoisted to HBM (once)
    b_arr = b_fold.reshape(Cout, 1).astype(jnp.float32)

    # ---- activations: cast once, NCHW -> NHWC, zero-pad spatially --------------
    x_pad = jnp.pad(jnp.transpose(x_nchw.astype(compute_dtype), (0, 2, 3, 1)),
                    ((0, 0), (p, p), (p, p), (0, 0)))

    vmem_limit = _vmem_budget_bytes()
    th = _pick_tile_h(H_out, W_out, Cin, Cout, k, stride, Wp,
                      jnp.dtype(compute_dtype).itemsize,
                      jnp.dtype(compute_dtype).itemsize,
                      jnp.dtype(out_dtype).itemsize,
                      tile_h, (vmem_limit * 3) // 4)
    n_h = H_out // th
    th_in = (th - 1) * stride + k

    kern = functools.partial(_conv_bn_relu_kernel, k=k, stride=stride, th=th,
                             w_out=W_out, cout_minor=cout_minor)

    flops = 2 * N * H_out * W_out * (k * k * Cin) * Cout + 2 * N * H_out * W_out * Cout
    bytes_accessed = (x_pad.size * x_pad.dtype.itemsize
                      + w_arr.size * w_arr.dtype.itemsize + b_arr.size * 4
                      + N * H_out * W_out * Cout * jnp.dtype(out_dtype).itemsize)

    def run(element_windows, single_buffer_consts):
        const_kw = {"pipeline_mode": pl.Buffered(1)} if single_buffer_consts else {}
        w_spec = pl.BlockSpec(w_arr.shape, lambda n, h: (0, 0, 0), **const_kw)
        b_spec = pl.BlockSpec((Cout, 1), lambda n, h: (0, 0), **const_kw)
        if element_windows:
            # overlapping halo windows DMA'd straight from the padded image:
            # the pl.Element dim's index_map returns an ELEMENT offset.
            x_arg = x_pad
            x_spec = pl.BlockSpec((None, pl.Element(th_in), Wp, Cin),
                                  lambda n, h: (n, h * th * stride, 0, 0))
        else:
            # fallback: materialize halo'd H tiles in HBM (extra repack).
            x_arg = jnp.stack(
                [lax.dynamic_slice_in_dim(x_pad, h * th * stride, th_in, axis=1)
                 for h in range(n_h)], axis=1)          # (N, n_h, TH_in, Wp, Cin)
            x_spec = pl.BlockSpec((None, None, th_in, Wp, Cin),
                                  lambda n, h: (n, h, 0, 0, 0))

        out = pl.pallas_call(
            kern,
            out_shape=jax.ShapeDtypeStruct((N, Cout, H_out * W_out), out_dtype),
            grid_spec=pltpu.PrefetchScalarGridSpec(
                num_scalar_prefetch=0,
                grid=(N, n_h),
                in_specs=[x_spec, w_spec, b_spec],
                out_specs=pl.BlockSpec((None, Cout, th * W_out),
                                       lambda n, h: (n, 0, h)),
            ),
            compiler_params=pltpu.CompilerParams(
                dimension_semantics=("parallel", "parallel"),
                vmem_limit_bytes=vmem_limit),
            cost_estimate=pl.CostEstimate(flops=flops, transcendentals=0,
                                          bytes_accessed=bytes_accessed),
        )(x_arg, w_arr, b_arr)
        return jax.block_until_ready(out)

    out = None
    last_err = None
    for element_windows in (True, False):
        for single_buffer_consts in (True, False):
            try:
                out = run(element_windows, single_buffer_consts)
            except Exception as e:  # noqa: BLE001 - fall back to the proven variant
                last_err = e
                out = None
                continue
            break
        if out is not None:
            break
    if out is None:
        raise last_err

    # (N, Cout, H_out*W_out) -> NCHW is a pure contiguous reshape (no transpose).
    return out.reshape(N, Cout, H_out, W_out)


def _reference(x, w, gamma, beta, mean, var, *, stride, eps):
    """Pure-JAX reference (matches nn.Conv2d + eval BatchNorm2d + ReLU)."""
    dn = ("NCHW", "OIHW", "NCHW")
    p = w.shape[-1] // 2
    y = lax.conv_general_dilated(x, w, (stride, stride), ((p, p), (p, p)),
                                 dimension_numbers=dn)
    inv = gamma / jnp.sqrt(var + eps)
    y = y * inv.reshape(1, -1, 1, 1) + (beta - mean * inv).reshape(1, -1, 1, 1)
    return jnp.maximum(y, 0.0)


if __name__ == "__main__":
    k_size, stride = 3, 1

    # ---- case 1: small Cout (< 128) -> (Cout, M) MXU orientation, NCHW direct ----
    N, Cin, Cout, H, W = 2, 4, 8, 16, 16
    key = jax.random.PRNGKey(0)
    kx, kw, kg, kb, km, kv = jax.random.split(key, 6)
    x = jax.random.normal(kx, (N, Cin, H, W), dtype=jnp.float32)
    conv_w = 0.1 * jax.random.normal(kw, (Cout, Cin, k_size, k_size), dtype=jnp.float32)
    bn_gamma = 1.0 + 0.1 * jax.random.normal(kg, (Cout,), dtype=jnp.float32)
    bn_beta = 0.1 * jax.random.normal(kb, (Cout,), dtype=jnp.float32)
    bn_mean = 0.1 * jax.random.normal(km, (Cout,), dtype=jnp.float32)
    bn_var = 0.5 + jax.random.uniform(kv, (Cout,), dtype=jnp.float32)

    ref = jax.block_until_ready(_reference(x, conv_w, bn_gamma, bn_beta, bn_mean,
                                           bn_var, stride=stride, eps=1e-5))

    # f32-MXU path: tight check of im2col / BN-fold / halo-window / tiling plumbing.
    out_f32 = jax.block_until_ready(conv_bn_relu(
        x, conv_w, bn_gamma, bn_beta, bn_mean, bn_var,
        stride=stride, tile_h=8, use_bf16=False))
    assert out_f32.shape == (N, Cout, H, W)
    assert jnp.allclose(out_f32, ref, atol=1e-3, rtol=1e-3)

    # bf16-MXU fast path (f32 accumulation): bf16-level tolerance.
    out_bf16 = jax.block_until_ready(conv_bn_relu(
        x, conv_w, bn_gamma, bn_beta, bn_mean, bn_var,
        stride=stride, tile_h=8, use_bf16=True))
    assert out_bf16.shape == (N, Cout, H, W)
    rel = jnp.max(jnp.abs(out_bf16 - ref)) / (jnp.max(jnp.abs(ref)) + 1e-6)
    assert float(rel) < 2e-2

    # ---- case 2: Cout >= 128 -> flipped MXU orientation (no operand transpose) ----
    N2, Cin2, Cout2, H2, W2 = 1, 8, 128, 16, 16
    k2x, k2w, k2g, k2b, k2m, k2v = jax.random.split(jax.random.PRNGKey(1), 6)
    x2 = jax.random.normal(k2x, (N2, Cin2, H2, W2), dtype=jnp.float32)
    w2 = 0.1 * jax.random.normal(k2w, (Cout2, Cin2, k_size, k_size), dtype=jnp.float32)
    g2 = 1.0 + 0.1 * jax.random.normal(k2g, (Cout2,), dtype=jnp.float32)
    b2 = 0.1 * jax.random.normal(k2b, (Cout2,), dtype=jnp.float32)
    m2 = 0.1 * jax.random.normal(k2m, (Cout2,), dtype=jnp.float32)
    v2 = 0.5 + jax.random.uniform(k2v, (Cout2,), dtype=jnp.float32)

    ref2 = jax.block_until_ready(_reference(x2, w2, g2, b2, m2, v2,
                                            stride=stride, eps=1e-5))
    out2 = jax.block_until_ready(conv_bn_relu(
        x2, w2, g2, b2, m2, v2, stride=stride, tile_h=8, use_bf16=False))
    assert out2.shape == (N2, Cout2, H2, W2)
    assert jnp.allclose(out2, ref2, atol=1e-3, rtol=1e-3)

    print("KERNEL_OK")
</pallas_src>

<mosaic_0001>
module attributes {stable_mosaic.version = 11 : i64} {
  func.func @_conv_bn_relu_kernel(%arg0: i32, %arg1: i32, %arg2: memref<1x1x10x18x4xf32, #tpu.memory_space<vmem>>, %arg3: memref<3x8x12xf32, #tpu.memory_space<vmem>>, %arg4: memref<8x1xf32, #tpu.memory_space<vmem>>, %arg5: memref<1x8x128xf32, #tpu.memory_space<vmem>>) attributes {dimension_semantics = [#tpu.dimension_semantics<parallel>, #tpu.dimension_semantics<parallel>], iteration_bounds = array<i64: 2, 2>, scalar_prefetch = 0 : i64, scratch_operands = 0 : i64, tpu.core_type = #tpu.core_type<tc>, window_params = [{transform_indices = @transform_0, window_bounds = array<i64: 1, 1, 10, 18, 4>}, {pipeline_mode = #tpu.pipeline_mode<synchronous>, transform_indices = @transform_1, window_bounds = array<i64: 3, 8, 12>}, {pipeline_mode = #tpu.pipeline_mode<synchronous>, transform_indices = @transform_2, window_bounds = array<i64: 8, 1>}, {transform_indices = @transform_3, window_bounds = array<i64: 1, 8, 128>}]} {
    %c0 = arith.constant 0 : index
    %c0_0 = arith.constant 0 : index
    %c0_1 = arith.constant 0 : index
    %c0_2 = arith.constant 0 : index
    %c0_3 = arith.constant 0 : index
    %0 = vector.load %arg2[%c0, %c0_0, %c0_1, %c0_2, %c0_3] : memref<1x1x10x18x4xf32, #tpu.memory_space<vmem>>, vector<1x1x10x18x4xf32>
    %1 = vector.shape_cast %0 : vector<1x1x10x18x4xf32> to vector<10x18x4xf32>
    %2 = vector.extract_strided_slice %1 {offsets = [0, 0, 0], sizes = [10, 16, 4], strides = [1, 1, 1]} : vector<10x18x4xf32> to vector<10x16x4xf32>
    %3 = vector.extract_strided_slice %1 {offsets = [0, 1, 0], sizes = [10, 16, 4], strides = [1, 1, 1]} : vector<10x18x4xf32> to vector<10x16x4xf32>
    %4 = vector.extract_strided_slice %1 {offsets = [0, 2, 0], sizes = [10, 16, 4], strides = [1, 1, 1]} : vector<10x18x4xf32> to vector<10x16x4xf32>
    %5 = vector.extract_strided_slice %2 {offsets = [0, 0, 0], sizes = [8, 16, 4], strides = [1, 1, 1]} : vector<10x16x4xf32> to vector<8x16x4xf32>
    %6 = vector.extract_strided_slice %3 {offsets = [0, 0, 0], sizes = [8, 16, 4], strides = [1, 1, 1]} : vector<10x16x4xf32> to vector<8x16x4xf32>
    %7 = vector.extract_strided_slice %4 {offsets = [0, 0, 0], sizes = [8, 16, 4], strides = [1, 1, 1]} : vector<10x16x4xf32> to vector<8x16x4xf32>
    %8 = tpu.concatenate %5, %6, %7 in 2 : vector<8x16x4xf32>, vector<8x16x4xf32>, vector<8x16x4xf32> -> vector<8x16x12xf32>
    %9 = vector.shape_cast %8 : vector<8x16x12xf32> to vector<128x12xf32>
    %c0_4 = arith.constant 0 : index
    %c0_5 = arith.constant 0 : index
    %c0_6 = arith.constant 0 : index
    %10 = vector.load %arg3[%c0_4, %c0_5, %c0_6] : memref<3x8x12xf32, #tpu.memory_space<vmem>>, vector<1x8x12xf32>
    %11 = vector.shape_cast %10 : vector<1x8x12xf32> to vector<8x12xf32>
    %cst = arith.constant dense<0.000000e+00> : vector<8x128xf32>
    %12 = tpu.matmul %11, %9, %cst {dimension_numbers = #tpu.dot_dimension_numbers<[1], [1], [0], [0], [0, 0, 1, 0], [], []>} : vector<8x12xf32>, vector<128x12xf32>, vector<8x128xf32> -> vector<8x128xf32>
    %13 = vector.extract_strided_slice %2 {offsets = [1, 0, 0], sizes = [8, 16, 4], strides = [1, 1, 1]} : vector<10x16x4xf32> to vector<8x16x4xf32>
    %14 = vector.extract_strided_slice %3 {offsets = [1, 0, 0], sizes = [8, 16, 4], strides = [1, 1, 1]} : vector<10x16x4xf32> to vector<8x16x4xf32>
    %15 = vector.extract_strided_slice %4 {offsets = [1, 0, 0], sizes = [8, 16, 4], strides = [1, 1, 1]} : vector<10x16x4xf32> to vector<8x16x4xf32>
    %16 = tpu.concatenate %13, %14, %15 in 2 : vector<8x16x4xf32>, vector<8x16x4xf32>, vector<8x16x4xf32> -> vector<8x16x12xf32>
    %17 = vector.shape_cast %16 : vector<8x16x12xf32> to vector<128x12xf32>
    %c1 = arith.constant 1 : index
    %c0_7 = arith.constant 0 : index
    %c0_8 = arith.constant 0 : index
    %18 = vector.load %arg3[%c1, %c0_7, %c0_8] : memref<3x8x12xf32, #tpu.memory_space<vmem>>, vector<1x8x12xf32>
    %19 = vector.shape_cast %18 : vector<1x8x12xf32> to vector<8x12xf32>
    %cst_9 = arith.constant dense<0.000000e+00> : vector<8x128xf32>
    %20 = tpu.matmul %19, %17, %cst_9 {dimension_numbers = #tpu.dot_dimension_numbers<[1], [1], [0], [0], [0, 0, 1, 0], [], []>} : vector<8x12xf32>, vector<128x12xf32>, vector<8x128xf32> -> vector<8x128xf32>
    %21 = arith.addf %12, %20 : vector<8x128xf32>
    %22 = vector.extract_strided_slice %2 {offsets = [2, 0, 0], sizes = [8, 16, 4], strides = [1, 1, 1]} : vector<10x16x4xf32> to vector<8x16x4xf32>
    %23 = vector.extract_strided_slice %3 {offsets = [2, 0, 0], sizes = [8, 16, 4], strides = [1, 1, 1]} : vector<10x16x4xf32> to vector<8x16x4xf32>
    %24 = vector.extract_strided_slice %4 {offsets = [2, 0, 0], sizes = [8, 16, 4], strides = [1, 1, 1]} : vector<10x16x4xf32> to vector<8x16x4xf32>
    %25 = tpu.concatenate %22, %23, %24 in 2 : vector<8x16x4xf32>, vector<8x16x4xf32>, vector<8x16x4xf32> -> vector<8x16x12xf32>
    %26 = vector.shape_cast %25 : vector<8x16x12xf32> to vector<128x12xf32>
    %c2 = arith.constant 2 : index
    %c0_10 = arith.constant 0 : index
    %c0_11 = arith.constant 0 : index
    %27 = vector.load %arg3[%c2, %c0_10, %c0_11] : memref<3x8x12xf32, #tpu.memory_space<vmem>>, vector<1x8x12xf32>
    %28 = vector.shape_cast %27 : vector<1x8x12xf32> to vector<8x12xf32>
    %cst_12 = arith.constant dense<0.000000e+00> : vector<8x128xf32>
    %29 = tpu.matmul %28, %26, %cst_12 {dimension_numbers = #tpu.dot_dimension_numbers<[1], [1], [0], [0], [0, 0, 1, 0], [], []>} : vector<8x12xf32>, vector<128x12xf32>, vector<8x128xf32> -> vector<8x128xf32>
    %30 = arith.addf %21, %29 : vector<8x128xf32>
    %c0_13 = arith.constant 0 : index
    %c0_14 = arith.constant 0 : index
    %31 = vector.load %arg4[%c0_13, %c0_14] : memref<8x1xf32, #tpu.memory_space<vmem>>, vector<8x1xf32>
    %32 = vector.broadcast %31 : vector<8x1xf32> to vector<8x128xf32>
    %33 = arith.addf %30, %32 : vector<8x128xf32>
    %cst_15 = arith.constant 0.000000e+00 : f32
    %34 = vector.broadcast %cst_15 : f32 to vector<8x128xf32>
    %35 = arith.maximumf %33, %34 : vector<8x128xf32>
    %c0_16 = arith.constant 0 : index
    %c0_17 = arith.constant 0 : index
    %c0_18 = arith.constant 0 : index
    %36 = vector.load %arg5[%c0_16, %c0_17, %c0_18] : memref<1x8x128xf32, #tpu.memory_space<vmem>>, vector<1x8x128xf32>
    %37 = vector.shape_cast %36 : vector<1x8x128xf32> to vector<8x128xf32>
    %38 = vector.shape_cast %35 : vector<8x128xf32> to vector<1x8x128xf32>
    tpu.vector_store %arg5[%c0_16, %c0_17, %c0_18], %38 {strides = array<i32>} : memref<1x8x128xf32, #tpu.memory_space<vmem>>, vector<1x8x128xf32>,
    return
  }
  func.func @transform_0(%arg0: i32, %arg1: i32) -> (i32, i32, i32, i32, i32) {
    %c0_i32 = arith.constant 0 : i32
    %c0_i32_0 = arith.constant 0 : i32
    %c0_i32_1 = arith.constant 0 : i32
    %c0_i32_2 = arith.constant 0 : i32
    return %arg0, %arg1, %c0_i32, %c0_i32_0, %c0_i32_1 : i32, i32, i32, i32, i32
  }
  func.func @transform_1(%arg0: i32, %arg1: i32) -> (i32, i32, i32) {
    %c0_i32 = arith.constant 0 : i32
    %c0_i32_0 = arith.constant 0 : i32
    %c0_i32_1 = arith.constant 0 : i32
    %c0_i32_2 = arith.constant 0 : i32
    return %c0_i32, %c0_i32_0, %c0_i32_1 : i32, i32, i32
  }
  func.func @transform_2(%arg0: i32, %arg1: i32) -> (i32, i32) {
    %c0_i32 = arith.constant 0 : i32
    %c0_i32_0 = arith.constant 0 : i32
    %c0_i32_1 = arith.constant 0 : i32
    return %c0_i32, %c0_i32_0 : i32, i32
  }
  func.func @transform_3(%arg0: i32, %arg1: i32) -> (i32, i32, i32) {
    %c0_i32 = arith.constant 0 : i32
    %c0_i32_0 = arith.constant 0 : i32
    return %arg0, %c0_i32, %arg1 : i32, i32, i32
  }
}

module attributes {stable_mosaic.version = 11 : i64} {
  func.func @_conv_bn_relu_kernel(%arg0: i32, %arg1: i32, %arg2: memref<1x1x10x18x4xf32, #tpu.memory_space<vmem>>, %arg3: memref<3x8x12xf32, #tpu.memory_space<vmem>>, %arg4: memref<8x1xf32, #tpu.memory_space<vmem>>, %arg5: memref<1x8x128xf32, #tpu.memory_space<vmem>>) attributes {dimension_semantics = [#tpu.dimension_semantics<parallel>, #tpu.dimension_semantics<parallel>], iteration_bounds = array<i64: 2, 2>, scalar_prefetch = 0 : i64, scratch_operands = 0 : i64, tpu.core_type = #tpu.core_type<tc>, window_params = [{transform_indices = @transform_0, window_bounds = array<i64: 1, 1, 10, 18, 4>}, {pipeline_mode = #tpu.pipeline_mode<synchronous>, transform_indices = @transform_1, window_bounds = array<i64: 3, 8, 12>}, {pipeline_mode = #tpu.pipeline_mode<synchronous>, transform_indices = @transform_2, window_bounds = array<i64: 8, 1>}, {transform_indices = @transform_3, window_bounds = array<i64: 1, 8, 128>}]} {
    %c0 = arith.constant 0 : index
    %c0_0 = arith.constant 0 : index
    %c0_1 = arith.constant 0 : index
    %c0_2 = arith.constant 0 : index
    %c0_3 = arith.constant 0 : index
    %0 = vector.load %arg2[%c0, %c0_0, %c0_1, %c0_2, %c0_3] : memref<1x1x10x18x4xf32, #tpu.memory_space<vmem>>, vector<1x1x10x18x4xf32>
    %1 = vector.shape_cast %0 : vector<1x1x10x18x4xf32> to vector<10x18x4xf32>
    %2 = vector.extract_strided_slice %1 {offsets = [0, 0, 0], sizes = [10, 16, 4], strides = [1, 1, 1]} : vector<10x18x4xf32> to vector<10x16x4xf32>
    %3 = vector.extract_strided_slice %1 {offsets = [0, 1, 0], sizes = [10, 16, 4], strides = [1, 1, 1]} : vector<10x18x4xf32> to vector<10x16x4xf32>
    %4 = vector.extract_strided_slice %1 {offsets = [0, 2, 0], sizes = [10, 16, 4], strides = [1, 1, 1]} : vector<10x18x4xf32> to vector<10x16x4xf32>
    %5 = vector.extract_strided_slice %2 {offsets = [0, 0, 0], sizes = [8, 16, 4], strides = [1, 1, 1]} : vector<10x16x4xf32> to vector<8x16x4xf32>
    %6 = vector.extract_strided_slice %3 {offsets = [0, 0, 0], sizes = [8, 16, 4], strides = [1, 1, 1]} : vector<10x16x4xf32> to vector<8x16x4xf32>
    %7 = vector.extract_strided_slice %4 {offsets = [0, 0, 0], sizes = [8, 16, 4], strides = [1, 1, 1]} : vector<10x16x4xf32> to vector<8x16x4xf32>
    %8 = tpu.concatenate %5, %6, %7 in 2 : vector<8x16x4xf32>, vector<8x16x4xf32>, vector<8x16x4xf32> -> vector<8x16x12xf32>
    %9 = vector.shape_cast %8 : vector<8x16x12xf32> to vector<128x12xf32>
    %c0_4 = arith.constant 0 : index
    %c0_5 = arith.constant 0 : index
    %c0_6 = arith.constant 0 : index
    %10 = vector.load %arg3[%c0_4, %c0_5, %c0_6] : memref<3x8x12xf32, #tpu.memory_space<vmem>>, vector<1x8x12xf32>
    %11 = vector.shape_cast %10 : vector<1x8x12xf32> to vector<8x12xf32>
    %cst = arith.constant dense<0.000000e+00> : vector<8x128xf32>
    %12 = tpu.matmul %11, %9, %cst {dimension_numbers = #tpu.dot_dimension_numbers<[1], [1], [0], [0], [0, 0, 1, 0], [], []>} : vector<8x12xf32>, vector<128x12xf32>, vector<8x128xf32> -> vector<8x128xf32>
    %13 = vector.extract_strided_slice %2 {offsets = [1, 0, 0], sizes = [8, 16, 4], strides = [1, 1, 1]} : vector<10x16x4xf32> to vector<8x16x4xf32>
    %14 = vector.extract_strided_slice %3 {offsets = [1, 0, 0], sizes = [8, 16, 4], strides = [1, 1, 1]} : vector<10x16x4xf32> to vector<8x16x4xf32>
    %15 = vector.extract_strided_slice %4 {offsets = [1, 0, 0], sizes = [8, 16, 4], strides = [1, 1, 1]} : vector<10x16x4xf32> to vector<8x16x4xf32>
    %16 = tpu.concatenate %13, %14, %15 in 2 : vector<8x16x4xf32>, vector<8x16x4xf32>, vector<8x16x4xf32> -> vector<8x16x12xf32>
    %17 = vector.shape_cast %16 : vector<8x16x12xf32> to vector<128x12xf32>
    %c1 = arith.constant 1 : index
    %c0_7 = arith.constant 0 : index
    %c0_8 = arith.constant 0 : index
    %18 = vector.load %arg3[%c1, %c0_7, %c0_8] : memref<3x8x12xf32, #tpu.memory_space<vmem>>, vector<1x8x12xf32>
    %19 = vector.shape_cast %18 : vector<1x8x12xf32> to vector<8x12xf32>
    %cst_9 = arith.constant dense<0.000000e+00> : vector<8x128xf32>
    %20 = tpu.matmul %19, %17, %cst_9 {dimension_numbers = #tpu.dot_dimension_numbers<[1], [1], [0], [0], [0, 0, 1, 0], [], []>} : vector<8x12xf32>, vector<128x12xf32>, vector<8x128xf32> -> vector<8x128xf32>
    %21 = arith.addf %12, %20 : vector<8x128xf32>
    %22 = vector.extract_strided_slice %2 {offsets = [2, 0, 0], sizes = [8, 16, 4], strides = [1, 1, 1]} : vector<10x16x4xf32> to vector<8x16x4xf32>
    %23 = vector.extract_strided_slice %3 {offsets = [2, 0, 0], sizes = [8, 16, 4], strides = [1, 1, 1]} : vector<10x16x4xf32> to vector<8x16x4xf32>
    %24 = vector.extract_strided_slice %4 {offsets = [2, 0, 0], sizes = [8, 16, 4], strides = [1, 1, 1]} : vector<10x16x4xf32> to vector<8x16x4xf32>
    %25 = tpu.concatenate %22, %23, %24 in 2 : vector<8x16x4xf32>, vector<8x16x4xf32>, vector<8x16x4xf32> -> vector<8x16x12xf32>
    %26 = vector.shape_cast %25 : vector<8x16x12xf32> to vector<128x12xf32>
    %c2 = arith.constant 2 : index
    %c0_10 = arith.constant 0 : index
    %c0_11 = arith.constant 0 : index
    %27 = vector.load %arg3[%c2, %c0_10, %c0_11] : memref<3x8x12xf32, #tpu.memory_space<vmem>>, vector<1x8x12xf32>
    %28 = vector.shape_cast %27 : vector<1x8x12xf32> to vector<8x12xf32>
    %cst_12 = arith.constant dense<0.000000e+00> : vector<8x128xf32>
    %29 = tpu.matmul %28, %26, %cst_12 {dimension_numbers = #tpu.dot_dimension_numbers<[1], [1], [0], [0], [0, 0, 1, 0], [], []>} : vector<8x12xf32>, vector<128x12xf32>, vector<8x128xf32> -> vector<8x128xf32>
    %30 = arith.addf %21, %29 : vector<8x128xf32>
    %c0_13 = arith.constant 0 : index
    %c0_14 = arith.constant 0 : index
    %31 = vector.load %arg4[%c0_13, %c0_14] : memref<8x1xf32, #tpu.memory_space<vmem>>, vector<8x1xf32>
    %32 = vector.broadcast %31 : vector<8x1xf32> to vector<8x128xf32>
    %33 = arith.addf %30, %32 : vector<8x128xf32>
    %cst_15 = arith.constant 0.000000e+00 : f32
    %34 = vector.broadcast %cst_15 : f32 to vector<8x128xf32>
    %35 = arith.maximumf %33, %34 : vector<8x128xf32>
    %c0_16 = arith.constant 0 : index
    %c0_17 = arith.constant 0 : index
    %c0_18 = arith.constant 0 : index
    %36 = vector.load %arg5[%c0_16, %c0_17, %c0_18] : memref<1x8x128xf32, #tpu.memory_space<vmem>>, vector<1x8x128xf32>
    %37 = vector.shape_cast %36 : vector<1x8x128xf32> to vector<8x128xf32>
    %38 = vector.shape_cast %35 : vector<8x128xf32> to vector<1x8x128xf32>
    tpu.vector_store %arg5[%c0_16, %c0_17, %c0_18], %38 {strides = array<i32>} : memref<1x8x128xf32, #tpu.memory_space<vmem>>, vector<1x8x128xf32>,
    return
  }
  func.func @transform_0(%arg0: i32, %arg1: i32) -> (i32, i32, i32, i32, i32) {
    %c0_i32 = arith.constant 0 : i32
    %c0_i32_0 = arith.constant 0 : i32
    %c0_i32_1 = arith.constant 0 : i32
    %c0_i32_2 = arith.constant 0 : i32
    return %arg0, %arg1, %c0_i32, %c0_i32_0, %c0_i32_1 : i32, i32, i32, i32, i32
  }
  func.func @transform_1(%arg0: i32, %arg1: i32) -> (i32, i32, i32) {
    %c0_i32 = arith.constant 0 : i32
    %c0_i32_0 = arith.constant 0 : i32
    %c0_i32_1 = arith.constant 0 : i32
    %c0_i32_2 = arith.constant 0 : i32
    return %c0_i32, %c0_i32_0, %c0_i32_1 : i32, i32, i32
  }
  func.func @transform_2(%arg0: i32, %arg1: i32) -> (i32, i32) {
    %c0_i32 = arith.constant 0 : i32
    %c0_i32_0 = arith.constant 0 : i32
    %c0_i32_1 = arith.constant 0 : i32
    return %c0_i32, %c0_i32_0 : i32, i32
  }
  func.func @transform_3(%arg0: i32, %arg1: i32) -> (i32, i32, i32) {
    %c0_i32 = arith.constant 0 : i32
    %c0_i32_0 = arith.constant 0 : i32
    return %arg0, %c0_i32, %arg1 : i32, i32, i32
  }
}

</mosaic_0001>

<llo_original>
// kernel: tpu_custom_call.1
$region0: #{tpu_custom_call.1}
  #allocation0 [shape = 'u32[]', space=smem, size = 0x4, offset = 0x4, fixed_abs, tag = 'smem constant byte address 0x4 - core index']
  #allocation1 [shape = 'u32[144,128]{1,0:T(1,128)}', space=vmem, size = 0x12000, scoped, tag = 'internal scratch']
  %s0 = inlined_call_operand.vmem [shape: f32[2,2,10,18,4], index: 0, kind: input, shape index: {}]
  %s1 = inlined_call_operand.vmem [shape: f32[3,8,12], index: 1, kind: input, shape index: {}]
  %s2 = inlined_call_operand.vmem [shape: f32[8,1], index: 2, kind: input, shape index: {}]
  %s3 = inlined_call_operand.hbm [shape: f32[2,8,256], index: 3, kind: output, shape index: {}]
  %s4 = sld [smem:[#allocation0]]
  $region45: #{tpu_custom_call.1} parent=0
    _
  %s6 = ssub.s32 1, %s4
  %s7 = scalar_select 0, %s6, %s4
  $region1: #{tpu_custom_call.1} parent=0
    #allocation2 [shape = 'u8[8192]{0}', space=vmem, size = 0x2000, scoped, tag = 'output window, operand 0']
    #allocation3 [shape = 's32[2]{0}', space=sflag, size = 0x8, scoped, tag = 'scoped memory for tpu_custom_call.1']
    %8 = vsyncpa [#allocation3], 0
    %s9 = scalar_lea.sflag [#allocation3], 1
    %10 = vsyncpa %s9, 0
    loop: start=0, step=1, limit=6
    $region2: #{tpu_custom_call.1} parent=1 // loop_pre_header
      _
    $region3: #{tpu_custom_call.1} parent=1 // loop_header
      %s12 = sphi 0, %s16
      %p13 = scmp.ge.s32.totalorder %s12, 6
      %s19 = sphi 0, %s31
      %s20 = sphi 0, %s27
      %s21 = sphi 0, %s19
      %s22 = sphi 0, %s20
      %s23 = sphi 0, %s21
      %s24 = sphi 0, %s22
      %s36 = sphi 0, %s38
      %s39 = sphi 0, %s36
      %s40 = sphi 0, %s39
      %s56 = sphi 0, %s40
      %s60 = sphi 0, %s60
      %s62 = sphi 0, %s60
      %s63 = sphi 0, %s62
      %s77 = sphi 0, %s63
      %s81 = sphi 0, %s81
      %s83 = sphi 0, %s81
      %s84 = sphi 0, %s83
      %s98 = sphi 0, %s84
      %s106 = sphi 0, %s108
      %s109 = sphi 0, %s106
      %s110 = sphi 0, %s109
      %s126 = sphi 0, %s110
    $region4: #{tpu_custom_call.1} parent=1 // loop_header_branch
      %15 = sbr.rel (%p13) target = $region8
    $region5: #{tpu_custom_call.1} parent=1 // loop_body
      %s17 = ssub.s32 %s12, 1
      %s18 = ssub.s32 %s12, 2
      %s25 = sadd.s32 1, %s20
      %p26 = scmp.ge.s32.totalorder %s25, 2
      %s27 = scalar_select %p26, 0, %s25
      %s28 = sadd.s32 1, %s19
      %s29 = scalar_select %p26, %s28, %s19
      %p30 = scmp.ge.s32.totalorder %s29, 2
      %s31 = scalar_select %p30, 0, %s29
      %s32 = ssub.s32 %s19, %s31
      %s33 = ssub.s32 %s20, %s27
      %s34 = sor.u32 %s32, %s33
      %p35 = scmp.eq.s32.totalorder %s34, 0
      %s37 = sadd.s32 %s36, 1
      %s38 = scalar_select %p35, %s36, %s37
      %p41 = pneg %p35
      %p42 = scmp.eq.s32.totalorder %s12, 3
      %p43 = por %p41, %p42
      %p44 = scmp.ne.s32.totalorder %s36, %s39
      %p45 = scmp.eq.s32.totalorder %s12, 0
      %p46 = por %p44, %p45
      %p47 = scmp.ne.s32.totalorder %s36, %s39
      %p48 = scmp.eq.s32.totalorder %s17, 3
      %p49 = por %p47, %p48
      %p50 = scmp.ne.s32.totalorder %s39, %s40
      %p51 = scmp.eq.s32.totalorder %s17, 0
      %p52 = por %p50, %p51
      %p53 = scmp.ne.s32.totalorder %s39, %s40
      %p54 = scmp.eq.s32.totalorder %s18, 3
      %p55 = por %p53, %p54
      %p57 = scmp.ne.s32.totalorder %s40, %s56
      %p58 = scmp.eq.s32.totalorder %s18, 0
      %p59 = por %p57, %p58
      %s61 = sadd.s32 %s60, 1
      %p64 = scmp.eq.s32.totalorder %s12, 3
      %p65 = scmp.ne.s32.totalorder %s60, %s62
      %p66 = scmp.eq.s32.totalorder %s12, 0
      %p67 = por %p65, %p66
      %p68 = scmp.ne.s32.totalorder %s60, %s62
      %p69 = scmp.eq.s32.totalorder %s17, 3
      %p70 = por %p68, %p69
      %p71 = scmp.ne.s32.totalorder %s62, %s63
      %p72 = scmp.eq.s32.totalorder %s17, 0
      %p73 = por %p71, %p72
      %p74 = scmp.ne.s32.totalorder %s62, %s63
      %p75 = scmp.eq.s32.totalorder %s18, 3
      %p76 = por %p74, %p75
      %p78 = scmp.ne.s32.totalorder %s63, %s77
      %p79 = scmp.eq.s32.totalorder %s18, 0
      %p80 = por %p78, %p79
      %s82 = sadd.s32 %s81, 1
      %p85 = scmp.eq.s32.totalorder %s12, 3
      %p86 = scmp.ne.s32.totalorder %s81, %s83
      %p87 = scmp.eq.s32.totalorder %s12, 0
      %p88 = por %p86, %p87
      %p89 = scmp.ne.s32.totalorder %s81, %s83
      %p90 = scmp.eq.s32.totalorder %s17, 3
      %p91 = por %p89, %p90
      %p92 = scmp.ne.s32.totalorder %s83, %s84
      %p93 = scmp.eq.s32.totalorder %s17, 0
      %p94 = por %p92, %p93
      %p95 = scmp.ne.s32.totalorder %s83, %s84
      %p96 = scmp.eq.s32.totalorder %s18, 3
      %p97 = por %p95, %p96
      %p99 = scmp.ne.s32.totalorder %s84, %s98
      %p100 = scmp.eq.s32.totalorder %s18, 0
      %p101 = por %p99, %p100
      %s102 = ssub.s32 %s19, %s31
      %s103 = ssub.s32 %s20, %s27
      %s104 = sor.u32 %s102, %s103
      %p105 = scmp.eq.s32.totalorder %s104, 0
      %s107 = sadd.s32 %s106, 1
      %s108 = scalar_select %p105, %s106, %s107
      %p111 = pneg %p105
      %p112 = scmp.eq.s32.totalorder %s12, 3
      %p113 = por %p111, %p112
      %p114 = scmp.ne.s32.totalorder %s106, %s109
      %p115 = scmp.eq.s32.totalorder %s12, 0
      %p116 = por %p114, %p115
      %p117 = scmp.ne.s32.totalorder %s106, %s109
      %p118 = scmp.eq.s32.totalorder %s17, 3
      %p119 = por %p117, %p118
      %p120 = scmp.ne.s32.totalorder %s109, %s110
      %p121 = scmp.eq.s32.totalorder %s17, 0
      %p122 = por %p120, %p121
      %p123 = scmp.ne.s32.totalorder %s109, %s110
      %p124 = scmp.eq.s32.totalorder %s18, 3
      %p125 = por %p123, %p124
      %p127 = scmp.ne.s32.totalorder %s110, %s126
      %p128 = scmp.eq.s32.totalorder %s18, 0
      %p129 = por %p127, %p128
      %p130 = scmp.le.s32.totalorder 1, %s12
      %p131 = scmp.lt.s32.totalorder %s12, 5
      %p132 = pnand %p130, %p131
      %p133 = pneg %p132
      // Predicated region
      $region9: #{tpu_custom_call.1} parent=5 // pred_check
        _
      $region10: #{tpu_custom_call.1} parent=5 // pred_check_branch
        %135 = sbr.rel (%p132) target = $region12
      $region11: #{tpu_custom_call.1} parent=5 // pred_region
        %s136 = ssub.s32 %s12, 1
        // Predicated region
        $region13: #{tpu_custom_call.1} parent=11 // pred_check
          %p137 = pneg %p73
        $region14: #{tpu_custom_call.1} parent=11 // pred_check_branch
          %139 = sbr.rel (%p137) target = $region16
        $region15: #{tpu_custom_call.1} parent=11 // pred_region
          _
        $region16: #{tpu_custom_call.1} parent=11 // pred_fallthru
          _
        // Predicated region
        $region17: #{tpu_custom_call.1} parent=11 // pred_check
          %p140 = pneg %p94
        $region18: #{tpu_custom_call.1} parent=11 // pred_check_branch
          %142 = sbr.rel (%p140) target = $region20
        $region19: #{tpu_custom_call.1} parent=11 // pred_region
          _
        $region20: #{tpu_custom_call.1} parent=11 // pred_fallthru
          _
      $region12: #{tpu_custom_call.1} parent=5 // pred_fallthru
        _
      %p143 = scmp.lt.s32.totalorder %s12, 4
      // Predicated region
      $region21: #{tpu_custom_call.1} parent=5 // pred_check
        %p144 = pneg %p143
      $region22: #{tpu_custom_call.1} parent=5 // pred_check_branch
        %146 = sbr.rel (%p144) target = $region24
      $region23: #{tpu_custom_call.1} parent=5 // pred_region
        // Predicated region
        $region25: #{tpu_custom_call.1} parent=23 // pred_check
          %p147 = pneg %p46
        $region26: #{tpu_custom_call.1} parent=23 // pred_check_branch
          %149 = sbr.rel (%p147) target = $region28
        $region27: #{tpu_custom_call.1} parent=23 // pred_region
          %p150 = scmp.lt.s32.totalorder %s19, 1
          %s151 = scalar_select %p150, %s19, 1
          %p152 = scmp.lt.s32.totalorder %s20, 1
          %s153 = scalar_select %p152, %s20, 1
          %s154 = smul.addr %s153, 30
          %s155 = smul.addr %s151, 60
          %s156 = sadd.s32 %s154, %s155
          %s157 = smul.addr %s156, 8
          %s158 = scalar_lea.vmem %s0, %s157
        $region28: #{tpu_custom_call.1} parent=23 // pred_fallthru
          _
      $region24: #{tpu_custom_call.1} parent=5 // pred_fallthru
        _
      %p159 = scmp.le.s32.totalorder 1, %s12
      %p160 = scmp.lt.s32.totalorder %s12, 5
      %p161 = pnand %p159, %p160
      %p162 = pneg %p161
      // Predicated region
      $region29: #{tpu_custom_call.1} parent=5 // pred_check
        _
      $region30: #{tpu_custom_call.1} parent=5 // pred_check_branch
        %164 = sbr.rel (%p161) target = $region32
      $region31: #{tpu_custom_call.1} parent=5 // pred_region
        %s165 = ssub.s32 %s12, 1
        %p166 = scmp.lt.s32.totalorder %s21, 1
        %s167 = scalar_select %p166, %s21, 1
        %p168 = scmp.lt.s32.totalorder %s22, 1
        %s169 = scalar_select %p168, %s22, 1
        %s170 = smul.addr %s169, 30
        %s171 = smul.addr %s167, 60
        %s172 = sadd.s32 %s170, %s171
        %s173 = smul.addr %s172, 8
        %s174 = scalar_lea.vmem %s0, %s173
        %p175 = pneg %p52
        %p176 = pneg %p49
        %p177 = pneg %p73
        %p178 = pneg %p70
        %p179 = pneg %p94
        %p180 = pneg %p91
        %p181 = pneg %p122
        %p182 = pneg %p119
        %s183 = sand.u32 %s109, 1
        %s184 = scalar_lea.sflag [#allocation3], %s183
        %s185 = sand.u32 %s109, 1
        %s186 = smul.addr %s185, 8
        %s187 = scalar_lea.vmem [#allocation2], %s186
        %p188 = scmp.lt.s32.totalorder %s21, 1
        %s189 = scalar_select %p188, %s21, 1
        %p190 = scmp.lt.s32.totalorder %s22, 1
        %s191 = scalar_select %p190, %s22, 1
        %s192 = smul.addr %s191, 30
        %s193 = smul.addr %s189, 60
        %s194 = sadd.s32 %s192, %s193
        %s195 = smul.addr %s194, 8
        %s196 = scalar_lea.vmem %s0, %s195
        %v197 = vld [vmem:[%s196] sm:$0xff]
        %v198 = vld [vmem:[%s196 + $0x8] sm:$0xff]
        %v199 = vld [vmem:[%s196 + $0x10] sm:$0x3]
        %v200 = vld [vmem:[%s196 + $0x18] sm:$0xff]
        %v201 = vld [vmem:[%s196 + $0x20] sm:$0xff]
        %v202 = vld [vmem:[%s196 + $0x28] sm:$0x3]
        %v203 = vld [vmem:[%s196 + $0x30] sm:$0xff]
        %v204 = vld [vmem:[%s196 + $0x38] sm:$0xff]
        %v205 = vld [vmem:[%s196 + $0x40] sm:$0x3]
        %v206 = vld [vmem:[%s196 + $0x48] sm:$0xff]
        %v207 = vld [vmem:[%s196 + $0x50] sm:$0xff]
        %v208 = vld [vmem:[%s196 + $0x58] sm:$0x3]
        %v209 = vld [vmem:[%s196 + $0x60] sm:$0xff]
        %v210 = vld [vmem:[%s196 + $0x68] sm:$0xff]
        %v211 = vld [vmem:[%s196 + $0x70] sm:$0x3]
        %v212 = vld [vmem:[%s196 + $0x78] sm:$0xff]
        %v213 = vld [vmem:[%s196 + $0x80] sm:$0xff]
        %v214 = vld [vmem:[%s196 + $0x88] sm:$0x3]
        %v215 = vld [vmem:[%s196 + $0x90] sm:$0xff]
        %v216 = vld [vmem:[%s196 + $0x98] sm:$0xff]
        %v217 = vld [vmem:[%s196 + $0xa0] sm:$0x3]
        %v218 = vld [vmem:[%s196 + $0xa8] sm:$0xff]
        %v219 = vld [vmem:[%s196 + $0xb0] sm:$0xff]
        %v220 = vld [vmem:[%s196 + $0xb8] sm:$0x3]
        %v221 = vld [vmem:[%s196 + $0xc0] sm:$0xff]
        %v222 = vld [vmem:[%s196 + $0xc8] sm:$0xff]
        %v223 = vld [vmem:[%s196 + $0xd0] sm:$0x3]
        %v224 = vld [vmem:[%s196 + $0xd8] sm:$0xff]
        %v225 = vld [vmem:[%s196 + $0xe0] sm:$0xff]
        %v226 = vld [vmem:[%s196 + $0xe8] sm:$0x3]
        %vm251 = vcmask 1046528
        %v252 = vrot.slane %v197, 1
        %v253 = vrot.slane %v198, 1
        %v254 = vsel %vm251, %v252, %v253
        %v255 = vrot.slane %v199, 1
        %v256 = vsel %vm251, %v253, %v255
        %v257 = vrot.slane %v200, 1
        %v258 = vrot.slane %v201, 1
        %v259 = vsel %vm251, %v257, %v258
        %v260 = vrot.slane %v202, 1
        %v261 = vsel %vm251, %v258, %v260
        %v262 = vrot.slane %v203, 1
        %v263 = vrot.slane %v204, 1
        %v264 = vsel %vm251, %v262, %v263
        %v265 = vrot.slane %v205, 1
        %v266 = vsel %vm251, %v263, %v265
        %v267 = vrot.slane %v206, 1
        %v268 = vrot.slane %v207, 1
        %v269 = vsel %vm251, %v267, %v268
        %v270 = vrot.slane %v208, 1
        %v271 = vsel %vm251, %v268, %v270
        %v272 = vrot.slane %v209, 1
        %v273 = vrot.slane %v210, 1
        %v274 = vsel %vm251, %v272, %v273
        %v275 = vrot.slane %v211, 1
        %v276 = vsel %vm251, %v273, %v275
        %v277 = vrot.slane %v212, 1
        %v278 = vrot.slane %v213, 1
        %v279 = vsel %vm251, %v277, %v278
        %v280 = vrot.slane %v214, 1
        %v281 = vsel %vm251, %v278, %v280
        %v282 = vrot.slane %v215, 1
        %v283 = vrot.slane %v216, 1
        %v284 = vsel %vm251, %v282, %v283
        %v285 = vrot.slane %v217, 1
        %v286 = vsel %vm251, %v283, %v285
        %v287 = vrot.slane %v218, 1
        %v288 = vrot.slane %v219, 1
        %v289 = vsel %vm251, %v287, %v288
        %v290 = vrot.slane %v220, 1
        %v291 = vsel %vm251, %v288, %v290
        %292 = vrot.lane.b32.xlu0 %v254, 4
        %v293 = vpop.permute.xlu0 %292
        %294 = vrot.lane.b32.xlu0 %v256, 4
        %v295 = vpop.permute.xlu0 %294
        %296 = vrot.lane.b32.xlu0 %v259, 4
        %v297 = vpop.permute.xlu0 %296
        %298 = vrot.lane.b32.xlu0 %v261, 4
        %v299 = vpop.permute.xlu0 %298
        %300 = vrot.lane.b32.xlu0 %v264, 4
        %v301 = vpop.permute.xlu0 %300
        %302 = vrot.lane.b32.xlu0 %v266, 4
        %v303 = vpop.permute.xlu0 %302
        %304 = vrot.lane.b32.xlu0 %v269, 4
        %v305 = vpop.permute.xlu0 %304
        %306 = vrot.lane.b32.xlu0 %v271, 4
        %v307 = vpop.permute.xlu0 %306
        %308 = vrot.lane.b32.xlu0 %v274, 4
        %v309 = vpop.permute.xlu0 %308
        %310 = vrot.lane.b32.xlu0 %v276, 4
        %v311 = vpop.permute.xlu0 %310
        %312 = vrot.lane.b32.xlu0 %v279, 4
        %v313 = vpop.permute.xlu0 %312
        %314 = vrot.lane.b32.xlu0 %v281, 4
        %v315 = vpop.permute.xlu0 %314
        %316 = vrot.lane.b32.xlu0 %v284, 4
        %v317 = vpop.permute.xlu0 %316
        %318 = vrot.lane.b32.xlu0 %v286, 4
        %v319 = vpop.permute.xlu0 %318
        %320 = vrot.lane.b32.xlu0 %v289, 4
        %v321 = vpop.permute.xlu0 %320
        %322 = vrot.lane.b32.xlu0 %v291, 4
        %v323 = vpop.permute.xlu0 %322
        %vm340 = vcmask 1045504
        %v341 = vrot.slane %v197, 2
        %v342 = vrot.slane %v198, 2
        %v343 = vsel %vm340, %v341, %v342
        %v344 = vrot.slane %v199, 2
        %v345 = vsel %vm340, %v342, %v344
        %v346 = vrot.slane %v200, 2
        %v347 = vrot.slane %v201, 2
        %v348 = vsel %vm340, %v346, %v347
        %v349 = vrot.slane %v202, 2
        %v350 = vsel %vm340, %v347, %v349
        %v351 = vrot.slane %v203, 2
        %v352 = vrot.slane %v204, 2
        %v353 = vsel %vm340, %v351, %v352
        %v354 = vrot.slane %v205, 2
        %v355 = vsel %vm340, %v352, %v354
        %v356 = vrot.slane %v206, 2
        %v357 = vrot.slane %v207, 2
        %v358 = vsel %vm340, %v356, %v357
        %v359 = vrot.slane %v208, 2
        %v360 = vsel %vm340, %v357, %v359
        %v361 = vrot.slane %v209, 2
        %v362 = vrot.slane %v210, 2
        %v363 = vsel %vm340, %v361, %v362
        %v364 = vrot.slane %v211, 2
        %v365 = vsel %vm340, %v362, %v364
        %v366 = vrot.slane %v212, 2
        %v367 = vrot.slane %v213, 2
        %v368 = vsel %vm340, %v366, %v367
        %v369 = vrot.slane %v214, 2
        %v370 = vsel %vm340, %v367, %v369
        %v371 = vrot.slane %v215, 2
        %v372 = vrot.slane %v216, 2
        %v373 = vsel %vm340, %v371, %v372
        %v374 = vrot.slane %v217, 2
        %v375 = vsel %vm340, %v372, %v374
        %v376 = vrot.slane %v218, 2
        %v377 = vrot.slane %v219, 2
        %v378 = vsel %vm340, %v376, %v377
        %v379 = vrot.slane %v220, 2
        %v380 = vsel %vm340, %v377, %v379
        %381 = vrot.lane.b32.xlu0 %v343, 8
        %v382 = vpop.permute.xlu0 %381
        %383 = vrot.lane.b32.xlu0 %v345, 8
        %v384 = vpop.permute.xlu0 %383
        %385 = vrot.lane.b32.xlu0 %v348, 8
        %v386 = vpop.permute.xlu0 %385
        %387 = vrot.lane.b32.xlu0 %v350, 8
        %v388 = vpop.permute.xlu0 %387
        %389 = vrot.lane.b32.xlu0 %v353, 8
        %v390 = vpop.permute.xlu0 %389
        %391 = vrot.lane.b32.xlu0 %v355, 8
        %v392 = vpop.permute.xlu0 %391
        %393 = vrot.lane.b32.xlu0 %v358, 8
        %v394 = vpop.permute.xlu0 %393
        %395 = vrot.lane.b32.xlu0 %v360, 8
        %v396 = vpop.permute.xlu0 %395
        %397 = vrot.lane.b32.xlu0 %v363, 8
        %v398 = vpop.permute.xlu0 %397
        %399 = vrot.lane.b32.xlu0 %v365, 8
        %v400 = vpop.permute.xlu0 %399
        %401 = vrot.lane.b32.xlu0 %v368, 8
        %v402 = vpop.permute.xlu0 %401
        %403 = vrot.lane.b32.xlu0 %v370, 8
        %v404 = vpop.permute.xlu0 %403
        %405 = vrot.lane.b32.xlu0 %v373, 8
        %v406 = vpop.permute.xlu0 %405
        %407 = vrot.lane.b32.xlu0 %v375, 8
        %v408 = vpop.permute.xlu0 %407
        %409 = vrot.lane.b32.xlu0 %v378, 8
        %v410 = vpop.permute.xlu0 %409
        %411 = vrot.lane.b32.xlu0 %v380, 8
        %v412 = vpop.permute.xlu0 %411
        %vm429 = vcmask 31744
        %v430 = vsel %vm429, %v197, %v293
        %v431 = vsel %vm429, %v198, %v295
        %v432 = vsel %vm429, %v200, %v297
        %v433 = vsel %vm429, %v201, %v299
        %v434 = vsel %vm429, %v203, %v301
        %v435 = vsel %vm429, %v204, %v303
        %v436 = vsel %vm429, %v206, %v305
        %v437 = vsel %vm429, %v207, %v307
        %v438 = vsel %vm429, %v209, %v309
        %v439 = vsel %vm429, %v210, %v311
        %v440 = vsel %vm429, %v212, %v313
        %v441 = vsel %vm429, %v213, %v315
        %v442 = vsel %vm429, %v215, %v317
        %v443 = vsel %vm429, %v216, %v319
        %v444 = vsel %vm429, %v218, %v321
        %v445 = vsel %vm429, %v219, %v323
        %vm446 = vcmask 64512
        %v447 = vsel %vm446, %v430, %v382
        %v448 = vsel %vm446, %v431, %v384
        %v449 = vsel %vm446, %v432, %v386
        %v450 = vsel %vm446, %v433, %v388
        %v451 = vsel %vm446, %v434, %v390
        %v452 = vsel %vm446, %v435, %v392
        %v453 = vsel %vm446, %v436, %v394
        %v454 = vsel %vm446, %v437, %v396
        %v455 = vsel %vm446, %v438, %v398
        %v456 = vsel %vm446, %v439, %v400
        %v457 = vsel %vm446, %v440, %v402
        %v458 = vsel %vm446, %v441, %v404
        %v459 = vsel %vm446, %v442, %v406
        %v460 = vsel %vm446, %v443, %v408
        %v461 = vsel %vm446, %v444, %v410
        %v462 = vsel %vm446, %v445, %v412
        %v463 = vld [vmem:[%s1] sm:$0xff]
        %v467 = vrot.slane %v221, 1
        %v468 = vrot.slane %v222, 1
        %v469 = vsel %vm251, %v467, %v468
        %v470 = vrot.slane %v223, 1
        %v471 = vsel %vm251, %v468, %v470
        %472 = vrot.lane.b32.xlu0 %v469, 4
        %v473 = vpop.permute.xlu0 %472
        %474 = vrot.lane.b32.xlu0 %v471, 4
        %v475 = vpop.permute.xlu0 %474
        %v478 = vrot.slane %v221, 2
        %v479 = vrot.slane %v222, 2
        %v480 = vsel %vm340, %v478, %v479
        %v481 = vrot.slane %v223, 2
        %v482 = vsel %vm340, %v479, %v481
        %483 = vrot.lane.b32.xlu0 %v480, 8
        %v484 = vpop.permute.xlu0 %483
        %485 = vrot.lane.b32.xlu0 %v482, 8
        %v486 = vpop.permute.xlu0 %485
        %v489 = vsel %vm429, %v221, %v473
        %v490 = vsel %vm429, %v222, %v475
        %v491 = vsel %vm446, %v489, %v484
        %v492 = vsel %vm446, %v490, %v486
        %s493 = scalar_lea.vmem %s1, 8
        %v494 = vld [vmem:[%s493] sm:$0xff]
        %vm495 = vcmask 97280
        %v497 = vsel %vm495, %v494, 0
        %v500 = vsel %vm495, %v449, 0
        %v503 = vsel %vm495, %v450, 0
        %v506 = vsel %vm495, %v451, 0
        %v509 = vsel %vm495, %v452, 0
        %v512 = vsel %vm495, %v453, 0
        %v515 = vsel %vm495, %v454, 0
        %v518 = vsel %vm495, %v455, 0
        %v521 = vsel %vm495, %v456, 0
        %v524 = vsel %vm495, %v457, 0
        %v527 = vsel %vm495, %v458, 0
        %v530 = vsel %vm495, %v459, 0
        %v533 = vsel %vm495, %v460, 0
        %v536 = vsel %vm495, %v461, 0
        %v539 = vsel %vm495, %v462, 0
        %v542 = vsel %vm495, %v491, 0
        %v545 = vsel %vm495, %v492, 0
        %547 = vmatprep.subr.mxu0 0.0
        %548 = vmatpush1.xpose.msra.mxu0 %v500
        %549 = vmatprep.subr.mxu0 0.0
        %550 = vmatpush1.xpose.msra.mxu0 %v503
        %551 = vmatprep.subr.mxu0 0.0
        %552 = vmatpush1.xpose.msra.mxu0 %v506
        %553 = vmatprep.subr.mxu0 0.0
        %554 = vmatpush1.xpose.msra.mxu0 %v509
        %555 = vmatprep.subr.mxu0 0.0
        %556 = vmatpush1.xpose.msra.mxu0 %v512
        %557 = vmatprep.subr.mxu0 0.0
        %558 = vmatpush1.xpose.msra.mxu0 %v515
        %559 = vmatprep.subr.mxu0 0.0
        %560 = vmatpush1.xpose.msra.mxu0 %v518
        %561 = vmatprep.subr.mxu0 0.0
        %562 = vmatpush1.xpose.msra.mxu0 %v521
        %563 = vmatprep.subr.mxu0 0.0
        %564 = vmatpush1.xpose.msra.mxu0 %v524
        %565 = vmatprep.subr.mxu0 0.0
        %566 = vmatpush1.xpose.msra.mxu0 %v527
        %567 = vmatprep.subr.mxu0 0.0
        %568 = vmatpush1.xpose.msra.mxu0 %v530
        %569 = vmatprep.subr.mxu0 0.0
        %570 = vmatpush1.xpose.msra.mxu0 %v533
        %571 = vmatprep.subr.mxu0 0.0
        %572 = vmatpush1.xpose.msra.mxu0 %v536
        %573 = vmatprep.subr.mxu0 0.0
        %574 = vmatpush1.xpose.msra.mxu0 %v539
        %575 = vmatprep.subr.mxu0 0.0
        %576 = vmatpush1.xpose.msra.mxu0 %v542
        %577 = vmatprep.subr.mxu0 0.0
        %578 = vmatpush1.xpose.msra.mxu0 %v545
        %579 = vmatprep.subr.mxu0 0.0
        %580 = vmatpush1.xpose.msra.mxu0 0.0
        %581 = vmatprep.subr.mxu0 0.0
        %582 = vmatpush1.xpose.msra.mxu0 0.0
        %583 = vmatprep.subr.mxu0 0.0
        %584 = vmatpush1.xpose.msra.mxu0 0.0
        %585 = vmatprep.subr.mxu0 0.0
        %586 = vmatpush1.xpose.msra.mxu0 0.0
        %587 = vmatprep.subr.mxu0 0.0
        %588 = vmatpush1.xpose.msra.mxu0 0.0
        %589 = vmatprep.subr.mxu0 0.0
        %590 = vmatpush1.xpose.msra.mxu0 0.0
        %591 = vmatprep.subr.mxu0 0.0
        %592 = vmatpush1.xpose.msra.mxu0 0.0
        %593 = vmatprep.subr.mxu0 0.0
        %594 = vmatpush1.xpose.msra.mxu0 0.0
        %595 = vmatprep.subr.mxu0 0.0
        %596 = vmatpush1.xpose.msra.mxu0 0.0
        %597 = vmatprep.subr.mxu0 0.0
        %598 = vmatpush1.xpose.msra.mxu0 0.0
        %599 = vmatprep.subr.mxu0 0.0
        %600 = vmatpush1.xpose.msra.mxu0 0.0
        %601 = vmatprep.subr.mxu0 0.0
        %602 = vmatpush1.xpose.msra.mxu0 0.0
        %603 = vmatprep.subr.mxu0 0.0
        %604 = vmatpush1.xpose.msra.mxu0 0.0
        %605 = vmatprep.subr.mxu0 0.0
        %606 = vmatpush1.xpose.msra.mxu0 0.0
        %607 = vmatprep.subr.mxu0 0.0
        %608 = vmatpush1.xpose.msra.mxu0 0.0
        %609 = vmatprep.subr.mxu0 0.0
        %610 = vmatpush1.xpose.msra.mxu0 0.0
        %611 = vmatprep.mubr.f32.mxu0 0.0
        %612 = vmatmul.mubr.f32.gmra.mrb[0].mxu0 %v497
        %v613 = vpop.f32.mrb[0].mxu0
        %v614 = vadd.f32 0.0, %v613
        %v615 = vpop.f32.mrb[0].mxu0
        %616 = vdwg.mxu0
        %v618 = vsel %vm495, %v463, 0
        %v621 = vsel %vm495, %v447, 0
        %v624 = vsel %vm495, %v448, 0
        %626 = vmatprep.subr.mxu0 0.0
        %627 = vmatpush1.xpose.msra.mxu0 %v621
        %628 = vmatprep.subr.mxu0 0.0
        %629 = vmatpush1.xpose.msra.mxu0 %v624
        %630 = vmatprep.subr.mxu0 0.0
        %631 = vmatpush1.xpose.msra.mxu0 %v500
        %632 = vmatprep.subr.mxu0 0.0
        %633 = vmatpush1.xpose.msra.mxu0 %v503
        %634 = vmatprep.subr.mxu0 0.0
        %635 = vmatpush1.xpose.msra.mxu0 %v506
        %636 = vmatprep.subr.mxu0 0.0
        %637 = vmatpush1.xpose.msra.mxu0 %v509
        %638 = vmatprep.subr.mxu0 0.0
        %639 = vmatpush1.xpose.msra.mxu0 %v512
        %640 = vmatprep.subr.mxu0 0.0
        %641 = vmatpush1.xpose.msra.mxu0 %v515
        %642 = vmatprep.subr.mxu0 0.0
        %643 = vmatpush1.xpose.msra.mxu0 %v518
        %644 = vmatprep.subr.mxu0 0.0
        %645 = vmatpush1.xpose.msra.mxu0 %v521
        %646 = vmatprep.subr.mxu0 0.0
        %647 = vmatpush1.xpose.msra.mxu0 %v524
        %648 = vmatprep.subr.mxu0 0.0
        %649 = vmatpush1.xpose.msra.mxu0 %v527
        %650 = vmatprep.subr.mxu0 0.0
        %651 = vmatpush1.xpose.msra.mxu0 %v530
        %652 = vmatprep.subr.mxu0 0.0
        %653 = vmatpush1.xpose.msra.mxu0 %v533
        %654 = vmatprep.subr.mxu0 0.0
        %655 = vmatpush1.xpose.msra.mxu0 %v536
        %656 = vmatprep.subr.mxu0 0.0
        %657 = vmatpush1.xpose.msra.mxu0 %v539
        %658 = vmatprep.subr.mxu0 0.0
        %659 = vmatpush1.xpose.msra.mxu0 0.0
        %660 = vmatprep.subr.mxu0 0.0
        %661 = vmatpush1.xpose.msra.mxu0 0.0
        %662 = vmatprep.subr.mxu0 0.0
        %663 = vmatpush1.xpose.msra.mxu0 0.0
        %664 = vmatprep.subr.mxu0 0.0
        %665 = vmatpush1.xpose.msra.mxu0 0.0
        %666 = vmatprep.subr.mxu0 0.0
        %667 = vmatpush1.xpose.msra.mxu0 0.0
        %668 = vmatprep.subr.mxu0 0.0
        %669 = vmatpush1.xpose.msra.mxu0 0.0
        %670 = vmatprep.subr.mxu0 0.0
        %671 = vmatpush1.xpose.msra.mxu0 0.0
        %672 = vmatprep.subr.mxu0 0.0
        %673 = vmatpush1.xpose.msra.mxu0 0.0
        %674 = vmatprep.subr.mxu0 0.0
        %675 = vmatpush1.xpose.msra.mxu0 0.0
        %676 = vmatprep.subr.mxu0 0.0
        %677 = vmatpush1.xpose.msra.mxu0 0.0
        %678 = vmatprep.subr.mxu0 0.0
        %679 = vmatpush1.xpose.msra.mxu0 0.0
        %680 = vmatprep.subr.mxu0 0.0
        %681 = vmatpush1.xpose.msra.mxu0 0.0
        %682 = vmatprep.subr.mxu0 0.0
        %683 = vmatpush1.xpose.msra.mxu0 0.0
        %684 = vmatprep.subr.mxu0 0.0
        %685 = vmatpush1.xpose.msra.mxu0 0.0
        %686 = vmatprep.subr.mxu0 0.0
        %687 = vmatpush1.xpose.msra.mxu0 0.0
        %688 = vmatprep.subr.mxu0 0.0
        %689 = vmatpush1.xpose.msra.mxu0 0.0
        %690 = vmatprep.mubr.f32.mxu0 0.0
        %691 = vmatmul.mubr.f32.gmra.mrb[0].mxu0 %v618
        %v692 = vpop.f32.mrb[0].mxu0
        %v693 = vadd.f32 %v614, %v692
        %v694 = vpop.f32.mrb[0].mxu0
        %695 = vdwg.mxu0
        %v699 = vrot.slane %v224, 1
        %v700 = vrot.slane %v225, 1
        %v701 = vsel %vm251, %v699, %v700
        %v702 = vrot.slane %v226, 1
        %v703 = vsel %vm251, %v700, %v702
        %704 = vrot.lane.b32.xlu0 %v701, 4
        %v705 = vpop.permute.xlu0 %704
        %706 = vrot.lane.b32.xlu0 %v703, 4
        %v707 = vpop.permute.xlu0 %706
        %v710 = vrot.slane %v224, 2
        %v711 = vrot.slane %v225, 2
        %v712 = vsel %vm340, %v710, %v711
        %v713 = vrot.slane %v226, 2
        %v714 = vsel %vm340, %v711, %v713
        %715 = vrot.lane.b32.xlu0 %v712, 8
        %v716 = vpop.permute.xlu0 %715
        %717 = vrot.lane.b32.xlu0 %v714, 8
        %v718 = vpop.permute.xlu0 %717
        %v721 = vsel %vm429, %v224, %v705
        %v722 = vsel %vm429, %v225, %v707
        %v723 = vsel %vm446, %v721, %v716
        %v724 = vsel %vm446, %v722, %v718
        %s725 = scalar_lea.vmem %s1, 16
        %v726 = vld [vmem:[%s725] sm:$0xff]
        %v728 = vsel %vm495, %v726, 0
        %v731 = vsel %vm495, %v723, 0
        %v734 = vsel %vm495, %v724, 0
        %736 = vmatprep.subr.mxu0 0.0
        %737 = vmatpush1.xpose.msra.mxu0 %v506
        %738 = vmatprep.subr.mxu0 0.0
        %739 = vmatpush1.xpose.msra.mxu0 %v509
        %740 = vmatprep.subr.mxu0 0.0
        %741 = vmatpush1.xpose.msra.mxu0 %v512
        %742 = vmatprep.subr.mxu0 0.0
        %743 = vmatpush1.xpose.msra.mxu0 %v515
        %744 = vmatprep.subr.mxu0 0.0
        %745 = vmatpush1.xpose.msra.mxu0 %v518
        %746 = vmatprep.subr.mxu0 0.0
        %747 = vmatpush1.xpose.msra.mxu0 %v521
        %748 = vmatprep.subr.mxu0 0.0
        %749 = vmatpush1.xpose.msra.mxu0 %v524
        %750 = vmatprep.subr.mxu0 0.0
        %751 = vmatpush1.xpose.msra.mxu0 %v527
        %752 = vmatprep.subr.mxu0 0.0
        %753 = vmatpush1.xpose.msra.mxu0 %v530
        %754 = vmatprep.subr.mxu0 0.0
        %755 = vmatpush1.xpose.msra.mxu0 %v533
        %756 = vmatprep.subr.mxu0 0.0
        %757 = vmatpush1.xpose.msra.mxu0 %v536
        %758 = vmatprep.subr.mxu0 0.0
        %759 = vmatpush1.xpose.msra.mxu0 %v539
        %760 = vmatprep.subr.mxu0 0.0
        %761 = vmatpush1.xpose.msra.mxu0 %v542
        %762 = vmatprep.subr.mxu0 0.0
        %763 = vmatpush1.xpose.msra.mxu0 %v545
        %764 = vmatprep.subr.mxu0 0.0
        %765 = vmatpush1.xpose.msra.mxu0 %v731
        %766 = vmatprep.subr.mxu0 0.0
        %767 = vmatpush1.xpose.msra.mxu0 %v734
        %768 = vmatprep.subr.mxu0 0.0
        %769 = vmatpush1.xpose.msra.mxu0 0.0
        %770 = vmatprep.subr.mxu0 0.0
        %771 = vmatpush1.xpose.msra.mxu0 0.0
        %772 = vmatprep.subr.mxu0 0.0
        %773 = vmatpush1.xpose.msra.mxu0 0.0
        %774 = vmatprep.subr.mxu0 0.0
        %775 = vmatpush1.xpose.msra.mxu0 0.0
        %776 = vmatprep.subr.mxu0 0.0
        %777 = vmatpush1.xpose.msra.mxu0 0.0
        %778 = vmatprep.subr.mxu0 0.0
        %779 = vmatpush1.xpose.msra.mxu0 0.0
        %780 = vmatprep.subr.mxu0 0.0
        %781 = vmatpush1.xpose.msra.mxu0 0.0
        %782 = vmatprep.subr.mxu0 0.0
        %783 = vmatpush1.xpose.msra.mxu0 0.0
        %784 = vmatprep.subr.mxu0 0.0
        %785 = vmatpush1.xpose.msra.mxu0 0.0
        %786 = vmatprep.subr.mxu0 0.0
        %787 = vmatpush1.xpose.msra.mxu0 0.0
        %788 = vmatprep.subr.mxu0 0.0
        %789 = vmatpush1.xpose.msra.mxu0 0.0
        %790 = vmatprep.subr.mxu0 0.0
        %791 = vmatpush1.xpose.msra.mxu0 0.0
        %792 = vmatprep.subr.mxu0 0.0
        %793 = vmatpush1.xpose.msra.mxu0 0.0
        %794 = vmatprep.subr.mxu0 0.0
        %795 = vmatpush1.xpose.msra.mxu0 0.0
        %796 = vmatprep.subr.mxu0 0.0
        %797 = vmatpush1.xpose.msra.mxu0 0.0
        %798 = vmatprep.subr.mxu0 0.0
        %799 = vmatpush1.xpose.msra.mxu0 0.0
        %800 = vmatprep.mubr.f32.mxu0 0.0
        %801 = vmatmul.mubr.f32.gmra.mrb[0].mxu0 %v728
        %v802 = vpop.f32.mrb[0].mxu0
        %v803 = vadd.f32 0.0, %v802
        %v804 = vpop.f32.mrb[0].mxu0
        %805 = vdwg.mxu0
        %v806 = vadd.f32 %v693, %v803
        %v807 = vld [vmem:[%s2] sm:$0xff]
        %809 = vset.pattern.permute.xlu0 0
        %810 = vperm.xlu0 %809, %v807
        %v811 = vpop.permute.xlu0 %810
        %v813 = vadd.f32 %v806, %v811
        %v814 = vmax.f32 %v813, 0.0
        %815 = vst [vmem:[%s187] sm:$0xff] %v814
        %s816 = sand.u32 %s109, 1
        %s817 = scalar_lea.sflag [#allocation3], %s816
        %s818 = sand.u32 %s109, 1
        %s819 = smul.addr %s818, 8
        %s820 = scalar_lea.vmem [#allocation2], %s819
        // Predicated region
        $region33: #{tpu_custom_call.1} parent=31 // pred_check
          %p821 = pneg %p119
        $region34: #{tpu_custom_call.1} parent=31 // pred_check_branch
          %823 = sbr.rel (%p821) target = $region36
        $region35: #{tpu_custom_call.1} parent=31 // pred_region
          %s825 = ssub.s32 128, 128
          %826 = vsyncadd %s817, %s825
          %s827 = smul.addr %s21, 2
          %s828 = sadd.s32 %s22, %s827
          %s829 = smul.addr %s828, 128
          %s830 = scalar_lea.hbm %s3, %s829
          %s832 = sshll.u32 %s820, 4
          %s833 = int_to_ptr.vmem [resolvable:$true] %s832
          %835 = dma.vmem_to_hbm [thread:$0]  %s833, 128, %s830, %s817
        $region36: #{tpu_custom_call.1} parent=31 // pred_fallthru
          _
      $region32: #{tpu_custom_call.1} parent=5 // pred_fallthru
        _
      %p836 = scmp.le.s32.totalorder 2, %s12
      // Predicated region
      $region37: #{tpu_custom_call.1} parent=5 // pred_check
        %p837 = pneg %p836
      $region38: #{tpu_custom_call.1} parent=5 // pred_check_branch
        %839 = sbr.rel (%p837) target = $region40
      $region39: #{tpu_custom_call.1} parent=5 // pred_region
        %s840 = ssub.s32 %s12, 2
        // Predicated region
        $region41: #{tpu_custom_call.1} parent=39 // pred_check
          %p841 = pneg %p125
        $region42: #{tpu_custom_call.1} parent=39 // pred_check_branch
          %843 = sbr.rel (%p841) target = $region44
        $region43: #{tpu_custom_call.1} parent=39 // pred_region
          %s844 = sand.u32 %s110, 1
          %s845 = scalar_lea.sflag [#allocation3], %s844
          %s846 = sand.u32 %s110, 1
          %s847 = smul.addr %s846, 8
          %s848 = scalar_lea.vmem [#allocation2], %s847
          %849 = dma.done %s845, 128
        $region44: #{tpu_custom_call.1} parent=39 // pred_fallthru
          _
      $region40: #{tpu_custom_call.1} parent=5 // pred_fallthru
        _
    $region6: #{tpu_custom_call.1} parent=1 // loop_footer
      %s16 = sadd.s32 1, %s12
    $region7: #{tpu_custom_call.1} parent=1 // loop_footer_branch
      %11 = sbr.rel target = $region3
    $region8: #{tpu_custom_call.1} parent=1 // loop_exit
      _
    %850 = vsyncpa [#allocation3], 1
    %s851 = scalar_lea.sflag [#allocation3], 1
    %852 = vsyncpa %s851, 1

// kernel: tpu_custom_call.1
$region0: #{tpu_custom_call.1}
  #allocation0 [shape = 'u32[]', space=smem, size = 0x4, offset = 0x4, fixed_abs, tag = 'smem constant byte address 0x4 - core index']
  #allocation1 [shape = 'u32[144,128]{1,0:T(1,128)}', space=vmem, size = 0x12000, scoped, tag = 'internal scratch']
  %s0 = inlined_call_operand.vmem [shape: f32[2,2,10,18,4], index: 0, kind: input, shape index: {}]
  %s1 = inlined_call_operand.vmem [shape: f32[3,8,12], index: 1, kind: input, shape index: {}]
  %s2 = inlined_call_operand.vmem [shape: f32[8,1], index: 2, kind: input, shape index: {}]
  %s3 = inlined_call_operand.hbm [shape: f32[2,8,256], index: 3, kind: output, shape index: {}]
  %s4 = sld [smem:[#allocation0]]
  $region45: #{tpu_custom_call.1} parent=0
    _
  %s6 = ssub.s32 1, %s4
  %s7 = scalar_select 0, %s6, %s4
  $region1: #{tpu_custom_call.1} parent=0
    #allocation2 [shape = 'u8[8192]{0}', space=vmem, size = 0x2000, scoped, tag = 'output window, operand 0']
    #allocation3 [shape = 's32[2]{0}', space=sflag, size = 0x8, scoped, tag = 'scoped memory for tpu_custom_call.1']
    %8 = vsyncpa [#allocation3], 0
    %s9 = scalar_lea.sflag [#allocation3], 1
    %10 = vsyncpa %s9, 0
    loop: start=0, step=1, limit=6
    $region2: #{tpu_custom_call.1} parent=1 // loop_pre_header
      _
    $region3: #{tpu_custom_call.1} parent=1 // loop_header
      %s12 = sphi 0, %s16
      %p13 = scmp.ge.s32.totalorder %s12, 6
      %s19 = sphi 0, %s31
      %s20 = sphi 0, %s27
      %s21 = sphi 0, %s19
      %s22 = sphi 0, %s20
      %s23 = sphi 0, %s21
      %s24 = sphi 0, %s22
      %s36 = sphi 0, %s38
      %s39 = sphi 0, %s36
      %s40 = sphi 0, %s39
      %s56 = sphi 0, %s40
      %s60 = sphi 0, %s60
      %s62 = sphi 0, %s60
      %s63 = sphi 0, %s62
      %s77 = sphi 0, %s63
      %s81 = sphi 0, %s81
      %s83 = sphi 0, %s81
      %s84 = sphi 0, %s83
      %s98 = sphi 0, %s84
      %s106 = sphi 0, %s108
      %s109 = sphi 0, %s106
      %s110 = sphi 0, %s109
      %s126 = sphi 0, %s110
    $region4: #{tpu_custom_call.1} parent=1 // loop_header_branch
      %15 = sbr.rel (%p13) target = $region8
    $region5: #{tpu_custom_call.1} parent=1 // loop_body
      %s17 = ssub.s32 %s12, 1
      %s18 = ssub.s32 %s12, 2
      %s25 = sadd.s32 1, %s20
      %p26 = scmp.ge.s32.totalorder %s25, 2
      %s27 = scalar_select %p26, 0, %s25
      %s28 = sadd.s32 1, %s19
      %s29 = scalar_select %p26, %s28, %s19
      %p30 = scmp.ge.s32.totalorder %s29, 2
      %s31 = scalar_select %p30, 0, %s29
      %s32 = ssub.s32 %s19, %s31
      %s33 = ssub.s32 %s20, %s27
      %s34 = sor.u32 %s32, %s33
      %p35 = scmp.eq.s32.totalorder %s34, 0
      %s37 = sadd.s32 %s36, 1
      %s38 = scalar_select %p35, %s36, %s37
      %p41 = pneg %p35
      %p42 = scmp.eq.s32.totalorder %s12, 3
      %p43 = por %p41, %p42
      %p44 = scmp.ne.s32.totalorder %s36, %s39
      %p45 = scmp.eq.s32.totalorder %s12, 0
      %p46 = por %p44, %p45
      %p47 = scmp.ne.s32.totalorder %s36, %s39
      %p48 = scmp.eq.s32.totalorder %s17, 3
      %p49 = por %p47, %p48
      %p50 = scmp.ne.s32.totalorder %s39, %s40
      %p51 = scmp.eq.s32.totalorder %s17, 0
      %p52 = por %p50, %p51
      %p53 = scmp.ne.s32.totalorder %s39, %s40
      %p54 = scmp.eq.s32.totalorder %s18, 3
      %p55 = por %p53, %p54
      %p57 = scmp.ne.s32.totalorder %s40, %s56
      %p58 = scmp.eq.s32.totalorder %s18, 0
      %p59 = por %p57, %p58
      %s61 = sadd.s32 %s60, 1
      %p64 = scmp.eq.s32.totalorder %s12, 3
      %p65 = scmp.ne.s32.totalorder %s60, %s62
      %p66 = scmp.eq.s32.totalorder %s12, 0
      %p67 = por %p65, %p66
      %p68 = scmp.ne.s32.totalorder %s60, %s62
      %p69 = scmp.eq.s32.totalorder %s17, 3
      %p70 = por %p68, %p69
      %p71 = scmp.ne.s32.totalorder %s62, %s63
      %p72 = scmp.eq.s32.totalorder %s17, 0
      %p73 = por %p71, %p72
      %p74 = scmp.ne.s32.totalorder %s62, %s63
      %p75 = scmp.eq.s32.totalorder %s18, 3
      %p76 = por %p74, %p75
      %p78 = scmp.ne.s32.totalorder %s63, %s77
      %p79 = scmp.eq.s32.totalorder %s18, 0
      %p80 = por %p78, %p79
      %s82 = sadd.s32 %s81, 1
      %p85 = scmp.eq.s32.totalorder %s12, 3
      %p86 = scmp.ne.s32.totalorder %s81, %s83
      %p87 = scmp.eq.s32.totalorder %s12, 0
      %p88 = por %p86, %p87
      %p89 = scmp.ne.s32.totalorder %s81, %s83
      %p90 = scmp.eq.s32.totalorder %s17, 3
      %p91 = por %p89, %p90
      %p92 = scmp.ne.s32.totalorder %s83, %s84
      %p93 = scmp.eq.s32.totalorder %s17, 0
      %p94 = por %p92, %p93
      %p95 = scmp.ne.s32.totalorder %s83, %s84
      %p96 = scmp.eq.s32.totalorder %s18, 3
      %p97 = por %p95, %p96
      %p99 = scmp.ne.s32.totalorder %s84, %s98
      %p100 = scmp.eq.s32.totalorder %s18, 0
      %p101 = por %p99, %p100
      %s102 = ssub.s32 %s19, %s31
      %s103 = ssub.s32 %s20, %s27
      %s104 = sor.u32 %s102, %s103
      %p105 = scmp.eq.s32.totalorder %s104, 0
      %s107 = sadd.s32 %s106, 1
      %s108 = scalar_select %p105, %s106, %s107
      %p111 = pneg %p105
      %p112 = scmp.eq.s32.totalorder %s12, 3
      %p113 = por %p111, %p112
      %p114 = scmp.ne.s32.totalorder %s106, %s109
      %p115 = scmp.eq.s32.totalorder %s12, 0
      %p116 = por %p114, %p115
      %p117 = scmp.ne.s32.totalorder %s106, %s109
      %p118 = scmp.eq.s32.totalorder %s17, 3
      %p119 = por %p117, %p118
      %p120 = scmp.ne.s32.totalorder %s109, %s110
      %p121 = scmp.eq.s32.totalorder %s17, 0
      %p122 = por %p120, %p121
      %p123 = scmp.ne.s32.totalorder %s109, %s110
      %p124 = scmp.eq.s32.totalorder %s18, 3
      %p125 = por %p123, %p124
      %p127 = scmp.ne.s32.totalorder %s110, %s126
      %p128 = scmp.eq.s32.totalorder %s18, 0
      %p129 = por %p127, %p128
      %p130 = scmp.le.s32.totalorder 1, %s12
      %p131 = scmp.lt.s32.totalorder %s12, 5
      %p132 = pnand %p130, %p131
      %p133 = pneg %p132
      // Predicated region
      $region9: #{tpu_custom_call.1} parent=5 // pred_check
        _
      $region10: #{tpu_custom_call.1} parent=5 // pred_check_branch
        %135 = sbr.rel (%p132) target = $region12
      $region11: #{tpu_custom_call.1} parent=5 // pred_region
        %s136 = ssub.s32 %s12, 1
        // Predicated region
        $region13: #{tpu_custom_call.1} parent=11 // pred_check
          %p137 = pneg %p73
        $region14: #{tpu_custom_call.1} parent=11 // pred_check_branch
          %139 = sbr.rel (%p137) target = $region16
        $region15: #{tpu_custom_call.1} parent=11 // pred_region
          _
        $region16: #{tpu_custom_call.1} parent=11 // pred_fallthru
          _
        // Predicated region
        $region17: #{tpu_custom_call.1} parent=11 // pred_check
          %p140 = pneg %p94
        $region18: #{tpu_custom_call.1} parent=11 // pred_check_branch
          %142 = sbr.rel (%p140) target = $region20
        $region19: #{tpu_custom_call.1} parent=11 // pred_region
          _
        $region20: #{tpu_custom_call.1} parent=11 // pred_fallthru
          _
      $region12: #{tpu_custom_call.1} parent=5 // pred_fallthru
        _
      %p143 = scmp.lt.s32.totalorder %s12, 4
      // Predicated region
      $region21: #{tpu_custom_call.1} parent=5 // pred_check
        %p144 = pneg %p143
      $region22: #{tpu_custom_call.1} parent=5 // pred_check_branch
        %146 = sbr.rel (%p144) target = $region24
      $region23: #{tpu_custom_call.1} parent=5 // pred_region
        // Predicated region
        $region25: #{tpu_custom_call.1} parent=23 // pred_check
          %p147 = pneg %p46
        $region26: #{tpu_custom_call.1} parent=23 // pred_check_branch
          %149 = sbr.rel (%p147) target = $region28
        $region27: #{tpu_custom_call.1} parent=23 // pred_region
          %p150 = scmp.lt.s32.totalorder %s19, 1
          %s151 = scalar_select %p150, %s19, 1
          %p152 = scmp.lt.s32.totalorder %s20, 1
          %s153 = scalar_select %p152, %s20, 1
          %s154 = smul.addr %s153, 30
          %s155 = smul.addr %s151, 60
          %s156 = sadd.s32 %s154, %s155
          %s157 = smul.addr %s156, 8
          %s158 = scalar_lea.vmem %s0, %s157
        $region28: #{tpu_custom_call.1} parent=23 // pred_fallthru
          _
      $region24: #{tpu_custom_call.1} parent=5 // pred_fallthru
        _
      %p159 = scmp.le.s32.totalorder 1, %s12
      %p160 = scmp.lt.s32.totalorder %s12, 5
      %p161 = pnand %p159, %p160
      %p162 = pneg %p161
      // Predicated region
      $region29: #{tpu_custom_call.1} parent=5 // pred_check
        _
      $region30: #{tpu_custom_call.1} parent=5 // pred_check_branch
        %164 = sbr.rel (%p161) target = $region32
      $region31: #{tpu_custom_call.1} parent=5 // pred_region
        %s165 = ssub.s32 %s12, 1
        %p166 = scmp.lt.s32.totalorder %s21, 1
        %s167 = scalar_select %p166, %s21, 1
        %p168 = scmp.lt.s32.totalorder %s22, 1
        %s169 = scalar_select %p168, %s22, 1
        %s170 = smul.addr %s169, 30
        %s171 = smul.addr %s167, 60
        %s172 = sadd.s32 %s170, %s171
        %s173 = smul.addr %s172, 8
        %s174 = scalar_lea.vmem %s0, %s173
        %p175 = pneg %p52
        %p176 = pneg %p49
        %p177 = pneg %p73
        %p178 = pneg %p70
        %p179 = pneg %p94
        %p180 = pneg %p91
        %p181 = pneg %p122
        %p182 = pneg %p119
        %s183 = sand.u32 %s109, 1
        %s184 = scalar_lea.sflag [#allocation3], %s183
        %s185 = sand.u32 %s109, 1
        %s186 = smul.addr %s185, 8
        %s187 = scalar_lea.vmem [#allocation2], %s186
        %p188 = scmp.lt.s32.totalorder %s21, 1
        %s189 = scalar_select %p188, %s21, 1
        %p190 = scmp.lt.s32.totalorder %s22, 1
        %s191 = scalar_select %p190, %s22, 1
        %s192 = smul.addr %s191, 30
        %s193 = smul.addr %s189, 60
        %s194 = sadd.s32 %s192, %s193
        %s195 = smul.addr %s194, 8
        %s196 = scalar_lea.vmem %s0, %s195
        %v197 = vld [vmem:[%s196] sm:$0xff]
        %v198 = vld [vmem:[%s196 + $0x8] sm:$0xff]
        %v199 = vld [vmem:[%s196 + $0x10] sm:$0x3]
        %v200 = vld [vmem:[%s196 + $0x18] sm:$0xff]
        %v201 = vld [vmem:[%s196 + $0x20] sm:$0xff]
        %v202 = vld [vmem:[%s196 + $0x28] sm:$0x3]
        %v203 = vld [vmem:[%s196 + $0x30] sm:$0xff]
        %v204 = vld [vmem:[%s196 + $0x38] sm:$0xff]
        %v205 = vld [vmem:[%s196 + $0x40] sm:$0x3]
        %v206 = vld [vmem:[%s196 + $0x48] sm:$0xff]
        %v207 = vld [vmem:[%s196 + $0x50] sm:$0xff]
        %v208 = vld [vmem:[%s196 + $0x58] sm:$0x3]
        %v209 = vld [vmem:[%s196 + $0x60] sm:$0xff]
        %v210 = vld [vmem:[%s196 + $0x68] sm:$0xff]
        %v211 = vld [vmem:[%s196 + $0x70] sm:$0x3]
        %v212 = vld [vmem:[%s196 + $0x78] sm:$0xff]
        %v213 = vld [vmem:[%s196 + $0x80] sm:$0xff]
        %v214 = vld [vmem:[%s196 + $0x88] sm:$0x3]
        %v215 = vld [vmem:[%s196 + $0x90] sm:$0xff]
        %v216 = vld [vmem:[%s196 + $0x98] sm:$0xff]
        %v217 = vld [vmem:[%s196 + $0xa0] sm:$0x3]
        %v218 = vld [vmem:[%s196 + $0xa8] sm:$0xff]
        %v219 = vld [vmem:[%s196 + $0xb0] sm:$0xff]
        %v220 = vld [vmem:[%s196 + $0xb8] sm:$0x3]
        %v221 = vld [vmem:[%s196 + $0xc0] sm:$0xff]
        %v222 = vld [vmem:[%s196 + $0xc8] sm:$0xff]
        %v223 = vld [vmem:[%s196 + $0xd0] sm:$0x3]
        %v224 = vld [vmem:[%s196 + $0xd8] sm:$0xff]
        %v225 = vld [vmem:[%s196 + $0xe0] sm:$0xff]
        %v226 = vld [vmem:[%s196 + $0xe8] sm:$0x3]
        %vm251 = vcmask 1046528
        %v252 = vrot.slane %v197, 1
        %v253 = vrot.slane %v198, 1
        %v254 = vsel %vm251, %v252, %v253
        %v255 = vrot.slane %v199, 1
        %v256 = vsel %vm251, %v253, %v255
        %v257 = vrot.slane %v200, 1
        %v258 = vrot.slane %v201, 1
        %v259 = vsel %vm251, %v257, %v258
        %v260 = vrot.slane %v202, 1
        %v261 = vsel %vm251, %v258, %v260
        %v262 = vrot.slane %v203, 1
        %v263 = vrot.slane %v204, 1
        %v264 = vsel %vm251, %v262, %v263
        %v265 = vrot.slane %v205, 1
        %v266 = vsel %vm251, %v263, %v265
        %v267 = vrot.slane %v206, 1
        %v268 = vrot.slane %v207, 1
        %v269 = vsel %vm251, %v267, %v268
        %v270 = vrot.slane %v208, 1
        %v271 = vsel %vm251, %v268, %v270
        %v272 = vrot.slane %v209, 1
        %v273 = vrot.slane %v210, 1
        %v274 = vsel %vm251, %v272, %v273
        %v275 = vrot.slane %v211, 1
        %v276 = vsel %vm251, %v273, %v275
        %v277 = vrot.slane %v212, 1
        %v278 = vrot.slane %v213, 1
        %v279 = vsel %vm251, %v277, %v278
        %v280 = vrot.slane %v214, 1
        %v281 = vsel %vm251, %v278, %v280
        %v282 = vrot.slane %v215, 1
        %v283 = vrot.slane %v216, 1
        %v284 = vsel %vm251, %v282, %v283
        %v285 = vrot.slane %v217, 1
        %v286 = vsel %vm251, %v283, %v285
        %v287 = vrot.slane %v218, 1
        %v288 = vrot.slane %v219, 1
        %v289 = vsel %vm251, %v287, %v288
        %v290 = vrot.slane %v220, 1
        %v291 = vsel %vm251, %v288, %v290
        %292 = vrot.lane.b32.xlu0 %v254, 4
        %v293 = vpop.permute.xlu0 %292
        %294 = vrot.lane.b32.xlu0 %v256, 4
        %v295 = vpop.permute.xlu0 %294
        %296 = vrot.lane.b32.xlu0 %v259, 4
        %v297 = vpop.permute.xlu0 %296
        %298 = vrot.lane.b32.xlu0 %v261, 4
        %v299 = vpop.permute.xlu0 %298
        %300 = vrot.lane.b32.xlu0 %v264, 4
        %v301 = vpop.permute.xlu0 %300
        %302 = vrot.lane.b32.xlu0 %v266, 4
        %v303 = vpop.permute.xlu0 %302
        %304 = vrot.lane.b32.xlu0 %v269, 4
        %v305 = vpop.permute.xlu0 %304
        %306 = vrot.lane.b32.xlu0 %v271, 4
        %v307 = vpop.permute.xlu0 %306
        %308 = vrot.lane.b32.xlu0 %v274, 4
        %v309 = vpop.permute.xlu0 %308
        %310 = vrot.lane.b32.xlu0 %v276, 4
        %v311 = vpop.permute.xlu0 %310
        %312 = vrot.lane.b32.xlu0 %v279, 4
        %v313 = vpop.permute.xlu0 %312
        %314 = vrot.lane.b32.xlu0 %v281, 4
        %v315 = vpop.permute.xlu0 %314
        %316 = vrot.lane.b32.xlu0 %v284, 4
        %v317 = vpop.permute.xlu0 %316
        %318 = vrot.lane.b32.xlu0 %v286, 4
        %v319 = vpop.permute.xlu0 %318
        %320 = vrot.lane.b32.xlu0 %v289, 4
        %v321 = vpop.permute.xlu0 %320
        %322 = vrot.lane.b32.xlu0 %v291, 4
        %v323 = vpop.permute.xlu0 %322
        %vm340 = vcmask 1045504
        %v341 = vrot.slane %v197, 2
        %v342 = vrot.slane %v198, 2
        %v343 = vsel %vm340, %v341, %v342
        %v344 = vrot.slane %v199, 2
        %v345 = vsel %vm340, %v342, %v344
        %v346 = vrot.slane %v200, 2
        %v347 = vrot.slane %v201, 2
        %v348 = vsel %vm340, %v346, %v347
        %v349 = vrot.slane %v202, 2
        %v350 = vsel %vm340, %v347, %v349
        %v351 = vrot.slane %v203, 2
        %v352 = vrot.slane %v204, 2
        %v353 = vsel %vm340, %v351, %v352
        %v354 = vrot.slane %v205, 2
        %v355 = vsel %vm340, %v352, %v354
        %v356 = vrot.slane %v206, 2
        %v357 = vrot.slane %v207, 2
        %v358 = vsel %vm340, %v356, %v357
        %v359 = vrot.slane %v208, 2
        %v360 = vsel %vm340, %v357, %v359
        %v361 = vrot.slane %v209, 2
        %v362 = vrot.slane %v210, 2
        %v363 = vsel %vm340, %v361, %v362
        %v364 = vrot.slane %v211, 2
        %v365 = vsel %vm340, %v362, %v364
        %v366 = vrot.slane %v212, 2
        %v367 = vrot.slane %v213, 2
        %v368 = vsel %vm340, %v366, %v367
        %v369 = vrot.slane %v214, 2
        %v370 = vsel %vm340, %v367, %v369
        %v371 = vrot.slane %v215, 2
        %v372 = vrot.slane %v216, 2
        %v373 = vsel %vm340, %v371, %v372
        %v374 = vrot.slane %v217, 2
        %v375 = vsel %vm340, %v372, %v374
        %v376 = vrot.slane %v218, 2
        %v377 = vrot.slane %v219, 2
        %v378 = vsel %vm340, %v376, %v377
        %v379 = vrot.slane %v220, 2
        %v380 = vsel %vm340, %v377, %v379
        %381 = vrot.lane.b32.xlu0 %v343, 8
        %v382 = vpop.permute.xlu0 %381
        %383 = vrot.lane.b32.xlu0 %v345, 8
        %v384 = vpop.permute.xlu0 %383
        %385 = vrot.lane.b32.xlu0 %v348, 8
        %v386 = vpop.permute.xlu0 %385
        %387 = vrot.lane.b32.xlu0 %v350, 8
        %v388 = vpop.permute.xlu0 %387
        %389 = vrot.lane.b32.xlu0 %v353, 8
        %v390 = vpop.permute.xlu0 %389
        %391 = vrot.lane.b32.xlu0 %v355, 8
        %v392 = vpop.permute.xlu0 %391
        %393 = vrot.lane.b32.xlu0 %v358, 8
        %v394 = vpop.permute.xlu0 %393
        %395 = vrot.lane.b32.xlu0 %v360, 8
        %v396 = vpop.permute.xlu0 %395
        %397 = vrot.lane.b32.xlu0 %v363, 8
        %v398 = vpop.permute.xlu0 %397
        %399 = vrot.lane.b32.xlu0 %v365, 8
        %v400 = vpop.permute.xlu0 %399
        %401 = vrot.lane.b32.xlu0 %v368, 8
        %v402 = vpop.permute.xlu0 %401
        %403 = vrot.lane.b32.xlu0 %v370, 8
        %v404 = vpop.permute.xlu0 %403
        %405 = vrot.lane.b32.xlu0 %v373, 8
        %v406 = vpop.permute.xlu0 %405
        %407 = vrot.lane.b32.xlu0 %v375, 8
        %v408 = vpop.permute.xlu0 %407
        %409 = vrot.lane.b32.xlu0 %v378, 8
        %v410 = vpop.permute.xlu0 %409
        %411 = vrot.lane.b32.xlu0 %v380, 8
        %v412 = vpop.permute.xlu0 %411
        %vm429 = vcmask 31744
        %v430 = vsel %vm429, %v197, %v293
        %v431 = vsel %vm429, %v198, %v295
        %v432 = vsel %vm429, %v200, %v297
        %v433 = vsel %vm429, %v201, %v299
        %v434 = vsel %vm429, %v203, %v301
        %v435 = vsel %vm429, %v204, %v303
        %v436 = vsel %vm429, %v206, %v305
        %v437 = vsel %vm429, %v207, %v307
        %v438 = vsel %vm429, %v209, %v309
        %v439 = vsel %vm429, %v210, %v311
        %v440 = vsel %vm429, %v212, %v313
        %v441 = vsel %vm429, %v213, %v315
        %v442 = vsel %vm429, %v215, %v317
        %v443 = vsel %vm429, %v216, %v319
        %v444 = vsel %vm429, %v218, %v321
        %v445 = vsel %vm429, %v219, %v323
        %vm446 = vcmask 64512
        %v447 = vsel %vm446, %v430, %v382
        %v448 = vsel %vm446, %v431, %v384
        %v449 = vsel %vm446, %v432, %v386
        %v450 = vsel %vm446, %v433, %v388
        %v451 = vsel %vm446, %v434, %v390
        %v452 = vsel %vm446, %v435, %v392
        %v453 = vsel %vm446, %v436, %v394
        %v454 = vsel %vm446, %v437, %v396
        %v455 = vsel %vm446, %v438, %v398
        %v456 = vsel %vm446, %v439, %v400
        %v457 = vsel %vm446, %v440, %v402
        %v458 = vsel %vm446, %v441, %v404
        %v459 = vsel %vm446, %v442, %v406
        %v460 = vsel %vm446, %v443, %v408
        %v461 = vsel %vm446, %v444, %v410
        %v462 = vsel %vm446, %v445, %v412
        %v463 = vld [vmem:[%s1] sm:$0xff]
        %v467 = vrot.slane %v221, 1
        %v468 = vrot.slane %v222, 1
        %v469 = vsel %vm251, %v467, %v468
        %v470 = vrot.slane %v223, 1
        %v471 = vsel %vm251, %v468, %v470
        %472 = vrot.lane.b32.xlu0 %v469, 4
        %v473 = vpop.permute.xlu0 %472
        %474 = vrot.lane.b32.xlu0 %v471, 4
        %v475 = vpop.permute.xlu0 %474
        %v478 = vrot.slane %v221, 2
        %v479 = vrot.slane %v222, 2
        %v480 = vsel %vm340, %v478, %v479
        %v481 = vrot.slane %v223, 2
        %v482 = vsel %vm340, %v479, %v481
        %483 = vrot.lane.b32.xlu0 %v480, 8
        %v484 = vpop.permute.xlu0 %483
        %485 = vrot.lane.b32.xlu0 %v482, 8
        %v486 = vpop.permute.xlu0 %485
        %v489 = vsel %vm429, %v221, %v473
        %v490 = vsel %vm429, %v222, %v475
        %v491 = vsel %vm446, %v489, %v484
        %v492 = vsel %vm446, %v490, %v486
        %s493 = scalar_lea.vmem %s1, 8
        %v494 = vld [vmem:[%s493] sm:$0xff]
        %vm495 = vcmask 97280
        %v497 = vsel %vm495, %v494, 0
        %v500 = vsel %vm495, %v449, 0
        %v503 = vsel %vm495, %v450, 0
        %v506 = vsel %vm495, %v451, 0
        %v509 = vsel %vm495, %v452, 0
        %v512 = vsel %vm495, %v453, 0
        %v515 = vsel %vm495, %v454, 0
        %v518 = vsel %vm495, %v455, 0
        %v521 = vsel %vm495, %v456, 0
        %v524 = vsel %vm495, %v457, 0
        %v527 = vsel %vm495, %v458, 0
        %v530 = vsel %vm495, %v459, 0
        %v533 = vsel %vm495, %v460, 0
        %v536 = vsel %vm495, %v461, 0
        %v539 = vsel %vm495, %v462, 0
        %v542 = vsel %vm495, %v491, 0
        %v545 = vsel %vm495, %v492, 0
        %547 = vmatprep.subr.mxu0 0.0
        %548 = vmatpush1.xpose.msra.mxu0 %v500
        %549 = vmatprep.subr.mxu0 0.0
        %550 = vmatpush1.xpose.msra.mxu0 %v503
        %551 = vmatprep.subr.mxu0 0.0
        %552 = vmatpush1.xpose.msra.mxu0 %v506
        %553 = vmatprep.subr.mxu0 0.0
        %554 = vmatpush1.xpose.msra.mxu0 %v509
        %555 = vmatprep.subr.mxu0 0.0
        %556 = vmatpush1.xpose.msra.mxu0 %v512
        %557 = vmatprep.subr.mxu0 0.0
        %558 = vmatpush1.xpose.msra.mxu0 %v515
        %559 = vmatprep.subr.mxu0 0.0
        %560 = vmatpush1.xpose.msra.mxu0 %v518
        %561 = vmatprep.subr.mxu0 0.0
        %562 = vmatpush1.xpose.msra.mxu0 %v521
        %563 = vmatprep.subr.mxu0 0.0
        %564 = vmatpush1.xpose.msra.mxu0 %v524
        %565 = vmatprep.subr.mxu0 0.0
        %566 = vmatpush1.xpose.msra.mxu0 %v527
        %567 = vmatprep.subr.mxu0 0.0
        %568 = vmatpush1.xpose.msra.mxu0 %v530
        %569 = vmatprep.subr.mxu0 0.0
        %570 = vmatpush1.xpose.msra.mxu0 %v533
        %571 = vmatprep.subr.mxu0 0.0
        %572 = vmatpush1.xpose.msra.mxu0 %v536
        %573 = vmatprep.subr.mxu0 0.0
        %574 = vmatpush1.xpose.msra.mxu0 %v539
        %575 = vmatprep.subr.mxu0 0.0
        %576 = vmatpush1.xpose.msra.mxu0 %v542
        %577 = vmatprep.subr.mxu0 0.0
        %578 = vmatpush1.xpose.msra.mxu0 %v545
        %579 = vmatprep.subr.mxu0 0.0
        %580 = vmatpush1.xpose.msra.mxu0 0.0
        %581 = vmatprep.subr.mxu0 0.0
        %582 = vmatpush1.xpose.msra.mxu0 0.0
        %583 = vmatprep.subr.mxu0 0.0
        %584 = vmatpush1.xpose.msra.mxu0 0.0
        %585 = vmatprep.subr.mxu0 0.0
        %586 = vmatpush1.xpose.msra.mxu0 0.0
        %587 = vmatprep.subr.mxu0 0.0
        %588 = vmatpush1.xpose.msra.mxu0 0.0
        %589 = vmatprep.subr.mxu0 0.0
        %590 = vmatpush1.xpose.msra.mxu0 0.0
        %591 = vmatprep.subr.mxu0 0.0
        %592 = vmatpush1.xpose.msra.mxu0 0.0
        %593 = vmatprep.subr.mxu0 0.0
        %594 = vmatpush1.xpose.msra.mxu0 0.0
        %595 = vmatprep.subr.mxu0 0.0
        %596 = vmatpush1.xpose.msra.mxu0 0.0
        %597 = vmatprep.subr.mxu0 0.0
        %598 = vmatpush1.xpose.msra.mxu0 0.0
        %599 = vmatprep.subr.mxu0 0.0
        %600 = vmatpush1.xpose.msra.mxu0 0.0
        %601 = vmatprep.subr.mxu0 0.0
        %602 = vmatpush1.xpose.msra.mxu0 0.0
        %603 = vmatprep.subr.mxu0 0.0
        %604 = vmatpush1.xpose.msra.mxu0 0.0
        %605 = vmatprep.subr.mxu0 0.0
        %606 = vmatpush1.xpose.msra.mxu0 0.0
        %607 = vmatprep.subr.mxu0 0.0
        %608 = vmatpush1.xpose.msra.mxu0 0.0
        %609 = vmatprep.subr.mxu0 0.0
        %610 = vmatpush1.xpose.msra.mxu0 0.0
        %611 = vmatprep.mubr.f32.mxu0 0.0
        %612 = vmatmul.mubr.f32.gmra.mrb[0].mxu0 %v497
        %v613 = vpop.f32.mrb[0].mxu0
        %v614 = vadd.f32 0.0, %v613
        %v615 = vpop.f32.mrb[0].mxu0
        %616 = vdwg.mxu0
        %v618 = vsel %vm495, %v463, 0
        %v621 = vsel %vm495, %v447, 0
        %v624 = vsel %vm495, %v448, 0
        %626 = vmatprep.subr.mxu0 0.0
        %627 = vmatpush1.xpose.msra.mxu0 %v621
        %628 = vmatprep.subr.mxu0 0.0
        %629 = vmatpush1.xpose.msra.mxu0 %v624
        %630 = vmatprep.subr.mxu0 0.0
        %631 = vmatpush1.xpose.msra.mxu0 %v500
        %632 = vmatprep.subr.mxu0 0.0
        %633 = vmatpush1.xpose.msra.mxu0 %v503
        %634 = vmatprep.subr.mxu0 0.0
        %635 = vmatpush1.xpose.msra.mxu0 %v506
        %636 = vmatprep.subr.mxu0 0.0
        %637 = vmatpush1.xpose.msra.mxu0 %v509
        %638 = vmatprep.subr.mxu0 0.0
        %639 = vmatpush1.xpose.msra.mxu0 %v512
        %640 = vmatprep.subr.mxu0 0.0
        %641 = vmatpush1.xpose.msra.mxu0 %v515
        %642 = vmatprep.subr.mxu0 0.0
        %643 = vmatpush1.xpose.msra.mxu0 %v518
        %644 = vmatprep.subr.mxu0 0.0
        %645 = vmatpush1.xpose.msra.mxu0 %v521
        %646 = vmatprep.subr.mxu0 0.0
        %647 = vmatpush1.xpose.msra.mxu0 %v524
        %648 = vmatprep.subr.mxu0 0.0
        %649 = vmatpush1.xpose.msra.mxu0 %v527
        %650 = vmatprep.subr.mxu0 0.0
        %651 = vmatpush1.xpose.msra.mxu0 %v530
        %652 = vmatprep.subr.mxu0 0.0
        %653 = vmatpush1.xpose.msra.mxu0 %v533
        %654 = vmatprep.subr.mxu0 0.0
        %655 = vmatpush1.xpose.msra.mxu0 %v536
        %656 = vmatprep.subr.mxu0 0.0
        %657 = vmatpush1.xpose.msra.mxu0 %v539
        %658 = vmatprep.subr.mxu0 0.0
        %659 = vmatpush1.xpose.msra.mxu0 0.0
        %660 = vmatprep.subr.mxu0 0.0
        %661 = vmatpush1.xpose.msra.mxu0 0.0
        %662 = vmatprep.subr.mxu0 0.0
        %663 = vmatpush1.xpose.msra.mxu0 0.0
        %664 = vmatprep.subr.mxu0 0.0
        %665 = vmatpush1.xpose.msra.mxu0 0.0
        %666 = vmatprep.subr.mxu0 0.0
        %667 = vmatpush1.xpose.msra.mxu0 0.0
        %668 = vmatprep.subr.mxu0 0.0
        %669 = vmatpush1.xpose.msra.mxu0 0.0
        %670 = vmatprep.subr.mxu0 0.0
        %671 = vmatpush1.xpose.msra.mxu0 0.0
        %672 = vmatprep.subr.mxu0 0.0
        %673 = vmatpush1.xpose.msra.mxu0 0.0
        %674 = vmatprep.subr.mxu0 0.0
        %675 = vmatpush1.xpose.msra.mxu0 0.0
        %676 = vmatprep.subr.mxu0 0.0
        %677 = vmatpush1.xpose.msra.mxu0 0.0
        %678 = vmatprep.subr.mxu0 0.0
        %679 = vmatpush1.xpose.msra.mxu0 0.0
        %680 = vmatprep.subr.mxu0 0.0
        %681 = vmatpush1.xpose.msra.mxu0 0.0
        %682 = vmatprep.subr.mxu0 0.0
        %683 = vmatpush1.xpose.msra.mxu0 0.0
        %684 = vmatprep.subr.mxu0 0.0
        %685 = vmatpush1.xpose.msra.mxu0 0.0
        %686 = vmatprep.subr.mxu0 0.0
        %687 = vmatpush1.xpose.msra.mxu0 0.0
        %688 = vmatprep.subr.mxu0 0.0
        %689 = vmatpush1.xpose.msra.mxu0 0.0
        %690 = vmatprep.mubr.f32.mxu0 0.0
        %691 = vmatmul.mubr.f32.gmra.mrb[0].mxu0 %v618
        %v692 = vpop.f32.mrb[0].mxu0
        %v693 = vadd.f32 %v614, %v692
        %v694 = vpop.f32.mrb[0].mxu0
        %695 = vdwg.mxu0
        %v699 = vrot.slane %v224, 1
        %v700 = vrot.slane %v225, 1
        %v701 = vsel %vm251, %v699, %v700
        %v702 = vrot.slane %v226, 1
        %v703 = vsel %vm251, %v700, %v702
        %704 = vrot.lane.b32.xlu0 %v701, 4
        %v705 = vpop.permute.xlu0 %704
        %706 = vrot.lane.b32.xlu0 %v703, 4
        %v707 = vpop.permute.xlu0 %706
        %v710 = vrot.slane %v224, 2
        %v711 = vrot.slane %v225, 2
        %v712 = vsel %vm340, %v710, %v711
        %v713 = vrot.slane %v226, 2
        %v714 = vsel %vm340, %v711, %v713
        %715 = vrot.lane.b32.xlu0 %v712, 8
        %v716 = vpop.permute.xlu0 %715
        %717 = vrot.lane.b32.xlu0 %v714, 8
        %v718 = vpop.permute.xlu0 %717
        %v721 = vsel %vm429, %v224, %v705
        %v722 = vsel %vm429, %v225, %v707
        %v723 = vsel %vm446, %v721, %v716
        %v724 = vsel %vm446, %v722, %v718
        %s725 = scalar_lea.vmem %s1, 16
        %v726 = vld [vmem:[%s725] sm:$0xff]
        %v728 = vsel %vm495, %v726, 0
        %v731 = vsel %vm495, %v723, 0
        %v734 = vsel %vm495, %v724, 0
        %736 = vmatprep.subr.mxu0 0.0
        %737 = vmatpush1.xpose.msra.mxu0 %v506
        %738 = vmatprep.subr.mxu0 0.0
        %739 = vmatpush1.xpose.msra.mxu0 %v509
        %740 = vmatprep.subr.mxu0 0.0
        %741 = vmatpush1.xpose.msra.mxu0 %v512
        %742 = vmatprep.subr.mxu0 0.0
        %743 = vmatpush1.xpose.msra.mxu0 %v515
        %744 = vmatprep.subr.mxu0 0.0
        %745 = vmatpush1.xpose.msra.mxu0 %v518
        %746 = vmatprep.subr.mxu0 0.0
        %747 = vmatpush1.xpose.msra.mxu0 %v521
        %748 = vmatprep.subr.mxu0 0.0
        %749 = vmatpush1.xpose.msra.mxu0 %v524
        %750 = vmatprep.subr.mxu0 0.0
        %751 = vmatpush1.xpose.msra.mxu0 %v527
        %752 = vmatprep.subr.mxu0 0.0
        %753 = vmatpush1.xpose.msra.mxu0 %v530
        %754 = vmatprep.subr.mxu0 0.0
        %755 = vmatpush1.xpose.msra.mxu0 %v533
        %756 = vmatprep.subr.mxu0 0.0
        %757 = vmatpush1.xpose.msra.mxu0 %v536
        %758 = vmatprep.subr.mxu0 0.0
        %759 = vmatpush1.xpose.msra.mxu0 %v539
        %760 = vmatprep.subr.mxu0 0.0
        %761 = vmatpush1.xpose.msra.mxu0 %v542
        %762 = vmatprep.subr.mxu0 0.0
        %763 = vmatpush1.xpose.msra.mxu0 %v545
        %764 = vmatprep.subr.mxu0 0.0
        %765 = vmatpush1.xpose.msra.mxu0 %v731
        %766 = vmatprep.subr.mxu0 0.0
        %767 = vmatpush1.xpose.msra.mxu0 %v734
        %768 = vmatprep.subr.mxu0 0.0
        %769 = vmatpush1.xpose.msra.mxu0 0.0
        %770 = vmatprep.subr.mxu0 0.0
        %771 = vmatpush1.xpose.msra.mxu0 0.0
        %772 = vmatprep.subr.mxu0 0.0
        %773 = vmatpush1.xpose.msra.mxu0 0.0
        %774 = vmatprep.subr.mxu0 0.0
        %775 = vmatpush1.xpose.msra.mxu0 0.0
        %776 = vmatprep.subr.mxu0 0.0
        %777 = vmatpush1.xpose.msra.mxu0 0.0
        %778 = vmatprep.subr.mxu0 0.0
        %779 = vmatpush1.xpose.msra.mxu0 0.0
        %780 = vmatprep.subr.mxu0 0.0
        %781 = vmatpush1.xpose.msra.mxu0 0.0
        %782 = vmatprep.subr.mxu0 0.0
        %783 = vmatpush1.xpose.msra.mxu0 0.0
        %784 = vmatprep.subr.mxu0 0.0
        %785 = vmatpush1.xpose.msra.mxu0 0.0
        %786 = vmatprep.subr.mxu0 0.0
        %787 = vmatpush1.xpose.msra.mxu0 0.0
        %788 = vmatprep.subr.mxu0 0.0
        %789 = vmatpush1.xpose.msra.mxu0 0.0
        %790 = vmatprep.subr.mxu0 0.0
        %791 = vmatpush1.xpose.msra.mxu0 0.0
        %792 = vmatprep.subr.mxu0 0.0
        %793 = vmatpush1.xpose.msra.mxu0 0.0
        %794 = vmatprep.subr.mxu0 0.0
        %795 = vmatpush1.xpose.msra.mxu0 0.0
        %796 = vmatprep.subr.mxu0 0.0
        %797 = vmatpush1.xpose.msra.mxu0 0.0
        %798 = vmatprep.subr.mxu0 0.0
        %799 = vmatpush1.xpose.msra.mxu0 0.0
        %800 = vmatprep.mubr.f32.mxu0 0.0
        %801 = vmatmul.mubr.f32.gmra.mrb[0].mxu0 %v728
        %v802 = vpop.f32.mrb[0].mxu0
        %v803 = vadd.f32 0.0, %v802
        %v804 = vpop.f32.mrb[0].mxu0
        %805 = vdwg.mxu0
        %v806 = vadd.f32 %v693, %v803
        %v807 = vld [vmem:[%s2] sm:$0xff]
        %809 = vset.pattern.permute.xlu0 0
        %810 = vperm.xlu0 %809, %v807
        %v811 = vpop.permute.xlu0 %810
        %v813 = vadd.f32 %v806, %v811
        %v814 = vmax.f32 %v813, 0.0
        %815 = vst [vmem:[%s187] sm:$0xff] %v814
        %s816 = sand.u32 %s109, 1
        %s817 = scalar_lea.sflag [#allocation3], %s816
        %s818 = sand.u32 %s109, 1
        %s819 = smul.addr %s818, 8
        %s820 = scalar_lea.vmem [#allocation2], %s819
        // Predicated region
        $region33: #{tpu_custom_call.1} parent=31 // pred_check
          %p821 = pneg %p119
        $region34: #{tpu_custom_call.1} parent=31 // pred_check_branch
          %823 = sbr.rel (%p821) target = $region36
        $region35: #{tpu_custom_call.1} parent=31 // pred_region
          %s825 = ssub.s32 128, 128
          %826 = vsyncadd %s817, %s825
          %s827 = smul.addr %s21, 2
          %s828 = sadd.s32 %s22, %s827
          %s829 = smul.addr %s828, 128
          %s830 = scalar_lea.hbm %s3, %s829
          %s832 = sshll.u32 %s820, 4
          %s833 = int_to_ptr.vmem [resolvable:$true] %s832
          %835 = dma.vmem_to_hbm [thread:$0]  %s833, 128, %s830, %s817
        $region36: #{tpu_custom_call.1} parent=31 // pred_fallthru
          _
      $region32: #{tpu_custom_call.1} parent=5 // pred_fallthru
        _
      %p836 = scmp.le.s32.totalorder 2, %s12
      // Predicated region
      $region37: #{tpu_custom_call.1} parent=5 // pred_check
        %p837 = pneg %p836
      $region38: #{tpu_custom_call.1} parent=5 // pred_check_branch
        %839 = sbr.rel (%p837) target = $region40
      $region39: #{tpu_custom_call.1} parent=5 // pred_region
        %s840 = ssub.s32 %s12, 2
        // Predicated region
        $region41: #{tpu_custom_call.1} parent=39 // pred_check
          %p841 = pneg %p125
        $region42: #{tpu_custom_call.1} parent=39 // pred_check_branch
          %843 = sbr.rel (%p841) target = $region44
        $region43: #{tpu_custom_call.1} parent=39 // pred_region
          %s844 = sand.u32 %s110, 1
          %s845 = scalar_lea.sflag [#allocation3], %s844
          %s846 = sand.u32 %s110, 1
          %s847 = smul.addr %s846, 8
          %s848 = scalar_lea.vmem [#allocation2], %s847
          %849 = dma.done %s845, 128
        $region44: #{tpu_custom_call.1} parent=39 // pred_fallthru
          _
      $region40: #{tpu_custom_call.1} parent=5 // pred_fallthru
        _
    $region6: #{tpu_custom_call.1} parent=1 // loop_footer
      %s16 = sadd.s32 1, %s12
    $region7: #{tpu_custom_call.1} parent=1 // loop_footer_branch
      %11 = sbr.rel target = $region3
    $region8: #{tpu_custom_call.1} parent=1 // loop_exit
      _
    %850 = vsyncpa [#allocation3], 1
    %s851 = scalar_lea.sflag [#allocation3], 1
    %852 = vsyncpa %s851, 1

</llo_original>
